<compile_context>
chip_gen: v7x
topology: tpu7x:2x2x1
jax: 0.10.0
libtpu: 0.0.40
codegen_flags: <defaults>
</compile_context>

<pallas_src>
import numpy as np
import jax
import jax.numpy as jnp
from jax import lax
from jax.experimental import pallas as pl
from jax.experimental.pallas import tpu as pltpu

NUM_TOKENS = 14
HIGHEST = lax.Precision.HIGHEST


# ----------------------------- Pallas kernel -----------------------------
def encoder_arb_kernel(
    x_ref,       # (T, B_BLK, D)   bf16, time-major embedded input
    wih_ref,     # (D, 8D)         bf16, fused+gate-permuted [W_ih_q | W_ih_k]
    bias_ref,    # (1, 8D)         f32,  fused+gate-permuted (b_ih + b_hh)
    whh_ref,     # (2D, 8D)        bf16, block-diagonal fused W_hh
    a_ref,       # (B_BLK, T, T)   f32 output
    gx_buf,      # VMEM (T, B_BLK, 8D) f32 scratch (used only for large tiles)
    h_buf,       # VMEM (B_BLK, T, 2D) f32 scratch: [h_q | h_k], batch-major
):
    T, B, D = x_ref.shape
    D2, D4, D6, D8 = 2 * D, 4 * D, 6 * D, 8 * D

    # ---- Hoisted input projection for BOTH LSTMs: one big bf16 MXU matmul. ----
    x2d = x_ref[...].reshape(T * B, D)                                    # (T*B, D) bf16
    gx = jnp.dot(x2d, wih_ref[...],
                 preferred_element_type=jnp.float32) + bias_ref[...]      # (T*B, 8D) f32

    # Keep gx in vregs when it comfortably fits the register file; otherwise stage
    # through VMEM scratch (large batch tiles) to avoid spills on the loop path.
    if T * B * D8 <= 32 * 1024:
        def gx_at(t):
            return gx[t * B:(t + 1) * B, :]
    else:
        gx_buf[...] = gx.reshape(T, B, D8)

        def gx_at(t):
            return gx_buf[t]

    whh = whh_ref[...]        # (2D, 8D) bf16, loaded once, resident across all steps

    # ---- Fused recurrence: carry [h_q|h_k], [c_q|c_k]. Gate column layout is
    #      [i_q i_k f_q f_k o_q o_k | g_q g_k] (sigmoid gates first, tanh gates last).
    h = jnp.zeros((B, D2), jnp.float32)
    c = jnp.zeros((B, D2), jnp.float32)
    # T is static & small here -> full static unroll of the serial recurrence.
    # TODO(synk): for long sequences switch to lax.fori_loop(..., unroll=4/8) with
    # dynamic-index stores to bound trace size and vreg pressure.
    for t in range(T):
        # Only the sequential h @ W_hh stays in the loop: bf16 operands, f32 acc.
        g = gx_at(t) + jnp.dot(h.astype(jnp.bfloat16), whh,
                               preferred_element_type=jnp.float32)        # (B, 8D) f32
        sg = jax.nn.sigmoid(g[:, :D6])     # one EUP pass: [i_q i_k f_q f_k o_q o_k]
        gg = jnp.tanh(g[:, D6:])           # one EUP pass: [g_q g_k]
        c = sg[:, D2:D4] * c + sg[:, :D2] * gg
        h = sg[:, D4:D6] * jnp.tanh(c)
        # Batch-major store with static slices -> no epilogue transpose needed.
        h_buf[:, t:t + 1, :] = h[:, None, :]

    # ---- Final batched q @ k^T: leading batch dim, bf16 operands, f32 accumulate. ----
    h_all = h_buf[...]                                                    # (B, T, 2D)
    q = h_all[:, :, :D].astype(jnp.bfloat16)
    k = h_all[:, :, D:].astype(jnp.bfloat16)
    a_ref[...] = lax.dot_general(
        q, k, dimension_numbers=(((2,), (2,)), ((0,), (0,))),
        preferred_element_type=jnp.float32)                               # (B, T, T)


# ----------------------------- wrapper -----------------------------
def _split_gate_cols(w_t, D):
    # w_t: (D, 4D) = W.T with PyTorch gate-row order [i, f, g, o]
    return (w_t[:, 0:D], w_t[:, D:2 * D], w_t[:, 2 * D:3 * D], w_t[:, 3 * D:4 * D])


def _choose_batch_tile(B):
    """Batch tile: multiple of 8 sublanes, capped at 128; prefer >=2 grid steps
    (v7x megacore) once the batch is big enough to split."""
    b8 = ((B + 7) // 8) * 8
    if b8 <= 8:
        return 8
    half = (((b8 + 1) // 2) + 7) // 8 * 8
    return min(128, half)


def encoder_arb_forward(tokens, params):
    """tokens: (B, T) int32. Returns A: (B, T, T) float32."""
    B, T = tokens.shape
    D = params["embed"].shape[1]

    emb = params["embed"][tokens].astype(jnp.float32)        # (B, T, D) gather (XLA glue)

    blk = _choose_batch_tile(B)
    B_pad = ((B + blk - 1) // blk) * blk
    if B_pad != B:
        emb = jnp.pad(emb, ((0, B_pad - B), (0, 0), (0, 0)))

    # Time-major bf16 input (feeds only the hoisted bf16 input projection).
    x_tm = jnp.transpose(emb, (1, 0, 2)).astype(jnp.bfloat16)             # (T, B_pad, D)

    # --- Fused, gate-permuted weights. PyTorch stores W as (4D, D), rows [i,f,g,o];
    #     target column layout is [i_q i_k f_q f_k o_q o_k g_q g_k]. ---
    wq_i, wq_f, wq_g, wq_o = _split_gate_cols(params["q"]["w_ih"].T, D)
    wk_i, wk_f, wk_g, wk_o = _split_gate_cols(params["k"]["w_ih"].T, D)
    wih_fused = jnp.concatenate(
        [wq_i, wk_i, wq_f, wk_f, wq_o, wk_o, wq_g, wk_g],
        axis=1).astype(jnp.bfloat16)                                      # (D, 8D)

    uq_i, uq_f, uq_g, uq_o = _split_gate_cols(params["q"]["w_hh"].T, D)
    uk_i, uk_f, uk_g, uk_o = _split_gate_cols(params["k"]["w_hh"].T, D)
    Z = jnp.zeros((D, D), jnp.float32)
    whh_fused = jnp.concatenate(
        [jnp.concatenate([uq_i, Z, uq_f, Z, uq_o, Z, uq_g, Z], axis=1),   # h_q rows
         jnp.concatenate([Z, uk_i, Z, uk_f, Z, uk_o, Z, uk_g], axis=1)],  # h_k rows
        axis=0).astype(jnp.bfloat16)                                      # (2D, 8D) block-diag

    bq = params["q"]["b_ih"] + params["q"]["b_hh"]
    bk = params["k"]["b_ih"] + params["k"]["b_hh"]
    bq_i, bq_f, bq_g, bq_o = bq[0:D], bq[D:2 * D], bq[2 * D:3 * D], bq[3 * D:4 * D]
    bk_i, bk_f, bk_g, bk_o = bk[0:D], bk[D:2 * D], bk[2 * D:3 * D], bk[3 * D:4 * D]
    bias_fused = jnp.concatenate(
        [bq_i, bk_i, bq_f, bk_f, bq_o, bk_o, bq_g, bk_g])[None, :].astype(jnp.float32)  # (1, 8D)

    grid = (B_pad // blk,)
    # NOTE: for long sequences the (blk, T, T) output tile and (T, blk, 8D) gx scratch
    # grow with T; add a T grid axis before they exceed the VMEM budget (esp. v7x 64 MiB).
    a_pad = pl.pallas_call(
        encoder_arb_kernel,
        out_shape=jax.ShapeDtypeStruct((B_pad, T, T), jnp.float32),
        grid_spec=pltpu.PrefetchScalarGridSpec(
            num_scalar_prefetch=0,
            grid=grid,
            in_specs=[
                pl.BlockSpec((T, blk, D), lambda b: (0, b, 0)),          # x tile (time-major)
                pl.BlockSpec((D, 8 * D), lambda b: (0, 0)),              # fused W_ih (resident)
                pl.BlockSpec((1, 8 * D), lambda b: (0, 0)),              # fused bias
                pl.BlockSpec((2 * D, 8 * D), lambda b: (0, 0)),          # block-diag W_hh
            ],
            out_specs=pl.BlockSpec((blk, T, T), lambda b: (b, 0, 0)),
            scratch_shapes=[
                pltpu.VMEM((T, blk, 8 * D), jnp.float32),                # hoisted input gates
                pltpu.VMEM((blk, T, 2 * D), jnp.float32),                # [h_q|h_k] batch-major
            ],
        ),
        compiler_params=pltpu.CompilerParams(
            dimension_semantics=("parallel",),       # batch tiles are independent
            vmem_limit_bytes=32 * 1024 * 1024,
        ),
    )(x_tm, wih_fused, bias_fused, whh_fused)

    return a_pad[:B]


# ----------------------- pure-JAX f32 reference (for checking) -----------------------
def _lstm_ref(x_btd, w_ih, w_hh, b_ih, b_hh):
    B, T, D = x_btd.shape

    def step(carry, x_t):
        h, c = carry
        gates = (jnp.dot(x_t, w_ih.T, precision=HIGHEST) + b_ih
                 + jnp.dot(h, w_hh.T, precision=HIGHEST) + b_hh)
        i_g = jax.nn.sigmoid(gates[:, 0 * D:1 * D])
        f_g = jax.nn.sigmoid(gates[:, 1 * D:2 * D])
        g_g = jnp.tanh(gates[:, 2 * D:3 * D])
        o_g = jax.nn.sigmoid(gates[:, 3 * D:4 * D])
        c_new = f_g * c + i_g * g_g
        h_new = o_g * jnp.tanh(c_new)
        return (h_new, c_new), h_new

    x_tbd = jnp.transpose(x_btd, (1, 0, 2))
    (_, _), hs = lax.scan(step, (jnp.zeros((B, D)), jnp.zeros((B, D))), x_tbd)
    return jnp.transpose(hs, (1, 0, 2))              # (B, T, D)


def encoder_arb_reference(tokens, params):
    emb = params["embed"][tokens].astype(jnp.float32)
    q = _lstm_ref(emb, params["q"]["w_ih"], params["q"]["w_hh"],
                  params["q"]["b_ih"], params["q"]["b_hh"])
    k = _lstm_ref(emb, params["k"]["w_ih"], params["k"]["w_hh"],
                  params["k"]["b_ih"], params["k"]["b_hh"])
    return jnp.einsum("btd,bsd->bts", q, k, precision=HIGHEST)


# ----------------------- deterministic parameter init -----------------------
def init_params(key, dim):
    k_emb, k_q, k_k = jax.random.split(key, 3)
    bound = 1.0 / np.sqrt(dim)

    def lstm_params(k):
        k1, k2, k3, k4 = jax.random.split(k, 4)
        return {
            "w_ih": jax.random.uniform(k1, (4 * dim, dim), jnp.float32, -bound, bound),
            "w_hh": jax.random.uniform(k2, (4 * dim, dim), jnp.float32, -bound, bound),
            "b_ih": jax.random.uniform(k3, (4 * dim,), jnp.float32, -bound, bound),
            "b_hh": jax.random.uniform(k4, (4 * dim,), jnp.float32, -bound, bound),
        }

    return {
        "embed": jax.random.normal(k_emb, (NUM_TOKENS, dim), jnp.float32),
        "q": lstm_params(k_q),
        "k": lstm_params(k_k),
    }


if __name__ == "__main__":
    B, T, DIM = 2, 8, 32
    key = jax.random.PRNGKey(0)
    k_par, k_tok = jax.random.split(key)
    params = init_params(k_par, DIM)
    tokens = jax.random.randint(k_tok, (B, T), 0, NUM_TOKENS, dtype=jnp.int32)

    out = jax.block_until_ready(encoder_arb_forward(tokens, params))
    ref = jax.block_until_ready(encoder_arb_reference(tokens, params))

    assert out.shape == (B, T, T), out.shape
    # Tolerance covers the deliberate bf16-MXU paths (input projection, recurrence
    # h@W_hh, final bmm) vs the all-f32 HIGHEST reference; any structural/permutation
    # bug would produce O(1) discrepancies.
    np.testing.assert_allclose(np.asarray(out), np.asarray(ref), rtol=5e-2, atol=5e-2)
    print("KERNEL_OK")
</pallas_src>

<mosaic_0001>
module attributes {stable_mosaic.version = 11 : i64} {
  func.func @encoder_arb_kernel(%arg0: i32, %arg1: memref<8x8x32xbf16, #tpu.memory_space<vmem>>, %arg2: memref<32x256xbf16, #tpu.memory_space<vmem>>, %arg3: memref<1x256xf32, #tpu.memory_space<vmem>>, %arg4: memref<64x256xbf16, #tpu.memory_space<vmem>>, %arg5: memref<8x8x8xf32, #tpu.memory_space<vmem>>, %arg6: memref<8x8x256xf32, #tpu.memory_space<vmem>>, %arg7: memref<8x8x64xf32, #tpu.memory_space<vmem>>) attributes {dimension_semantics = [#tpu.dimension_semantics<parallel>], iteration_bounds = array<i64: 1>, scalar_prefetch = 0 : i64, scratch_operands = 2 : i64, tpu.core_type = #tpu.core_type<tc>, window_params = [{transform_indices = @transform_0, window_bounds = array<i64: 8, 8, 32>}, {pipeline_mode = #tpu.pipeline_mode<synchronous>, transform_indices = @transform_1, window_bounds = array<i64: 32, 256>}, {pipeline_mode = #tpu.pipeline_mode<synchronous>, transform_indices = @transform_2, window_bounds = array<i64: 1, 256>}, {pipeline_mode = #tpu.pipeline_mode<synchronous>, transform_indices = @transform_3, window_bounds = array<i64: 64, 256>}, {transform_indices = @transform_4, window_bounds = array<i64: 8, 8, 8>}]} {
    %c0 = arith.constant 0 : index
    %c0_0 = arith.constant 0 : index
    %c0_1 = arith.constant 0 : index
    %0 = vector.load %arg1[%c0, %c0_0, %c0_1] : memref<8x8x32xbf16, #tpu.memory_space<vmem>>, vector<8x8x32xbf16>
    %1 = vector.shape_cast %0 : vector<8x8x32xbf16> to vector<64x32xbf16>
    %c0_2 = arith.constant 0 : index
    %c0_3 = arith.constant 0 : index
    %2 = vector.load %arg2[%c0_2, %c0_3] : memref<32x256xbf16, #tpu.memory_space<vmem>>, vector<32x256xbf16>
    %cst = arith.constant dense<0.000000e+00> : vector<64x256xf32>
    %3 = tpu.matmul %1, %2, %cst {dimension_numbers = #tpu.dot_dimension_numbers<[1], [0], [0], [1], [0, 0, 1, 1], [], []>} : vector<64x32xbf16>, vector<32x256xbf16>, vector<64x256xf32> -> vector<64x256xf32>
    %c0_4 = arith.constant 0 : index
    %c0_5 = arith.constant 0 : index
    %4 = vector.load %arg3[%c0_4, %c0_5] : memref<1x256xf32, #tpu.memory_space<vmem>>, vector<1x256xf32>
    %5 = vector.broadcast %4 : vector<1x256xf32> to vector<64x256xf32>
    %6 = arith.addf %3, %5 : vector<64x256xf32>
    %c0_6 = arith.constant 0 : index
    %c0_7 = arith.constant 0 : index
    %7 = vector.load %arg4[%c0_6, %c0_7] : memref<64x256xbf16, #tpu.memory_space<vmem>>, vector<64x256xbf16>
    %cst_8 = arith.constant 0.000000e+00 : f32
    %8 = vector.broadcast %cst_8 : f32 to vector<8x64xf32>
    %cst_9 = arith.constant 0.000000e+00 : f32
    %9 = vector.broadcast %cst_9 : f32 to vector<8x64xf32>
    %10 = vector.extract_strided_slice %6 {offsets = [0, 0], sizes = [8, 256], strides = [1, 1]} : vector<64x256xf32> to vector<8x256xf32>
    %11 = arith.truncf %8 : vector<8x64xf32> to vector<8x64xbf16>
    %cst_10 = arith.constant dense<0.000000e+00> : vector<8x256xf32>
    %12 = tpu.matmul %11, %7, %cst_10 {dimension_numbers = #tpu.dot_dimension_numbers<[1], [0], [0], [1], [0, 0, 1, 1], [], []>} : vector<8x64xbf16>, vector<64x256xbf16>, vector<8x256xf32> -> vector<8x256xf32>
    %13 = arith.addf %10, %12 : vector<8x256xf32>
    %14 = vector.extract_strided_slice %13 {offsets = [0, 0], sizes = [8, 192], strides = [1, 1]} : vector<8x256xf32> to vector<8x192xf32>
    %15 = arith.negf %14 : vector<8x192xf32>
    %16 = math.exp %15 : vector<8x192xf32>
    %cst_11 = arith.constant 1.000000e+00 : f32
    %17 = vector.broadcast %cst_11 : f32 to vector<8x192xf32>
    %18 = arith.addf %17, %16 : vector<8x192xf32>
    %19 = arith.divf %17, %18 : vector<8x192xf32>
    %20 = vector.extract_strided_slice %13 {offsets = [0, 192], sizes = [8, 64], strides = [1, 1]} : vector<8x256xf32> to vector<8x64xf32>
    %21 = math.tanh %20 : vector<8x64xf32>
    %22 = vector.extract_strided_slice %19 {offsets = [0, 64], sizes = [8, 64], strides = [1, 1]} : vector<8x192xf32> to vector<8x64xf32>
    %23 = arith.mulf %22, %9 : vector<8x64xf32>
    %24 = vector.extract_strided_slice %19 {offsets = [0, 0], sizes = [8, 64], strides = [1, 1]} : vector<8x192xf32> to vector<8x64xf32>
    %25 = arith.mulf %24, %21 : vector<8x64xf32>
    %26 = arith.addf %23, %25 : vector<8x64xf32>
    %27 = vector.extract_strided_slice %19 {offsets = [0, 128], sizes = [8, 64], strides = [1, 1]} : vector<8x192xf32> to vector<8x64xf32>
    %28 = math.tanh %26 : vector<8x64xf32>
    %29 = arith.mulf %27, %28 : vector<8x64xf32>
    %30 = vector.shape_cast %29 : vector<8x64xf32> to vector<8x1x64xf32>
    %c0_12 = arith.constant 0 : index
    %c0_13 = arith.constant 0 : index
    %c0_14 = arith.constant 0 : index
    %31 = vector.load %arg7[%c0_12, %c0_13, %c0_14] : memref<8x8x64xf32, #tpu.memory_space<vmem>>, vector<8x1x64xf32>
    tpu.vector_store %arg7[%c0_12, %c0_13, %c0_14], %30 {strides = array<i32>} : memref<8x8x64xf32, #tpu.memory_space<vmem>>, vector<8x1x64xf32>,
    %32 = vector.extract_strided_slice %6 {offsets = [8, 0], sizes = [8, 256], strides = [1, 1]} : vector<64x256xf32> to vector<8x256xf32>
    %33 = arith.truncf %29 : vector<8x64xf32> to vector<8x64xbf16>
    %cst_15 = arith.constant dense<0.000000e+00> : vector<8x256xf32>
    %34 = tpu.matmul %33, %7, %cst_15 {dimension_numbers = #tpu.dot_dimension_numbers<[1], [0], [0], [1], [0, 0, 1, 1], [], []>} : vector<8x64xbf16>, vector<64x256xbf16>, vector<8x256xf32> -> vector<8x256xf32>
    %35 = arith.addf %32, %34 : vector<8x256xf32>
    %36 = vector.extract_strided_slice %35 {offsets = [0, 0], sizes = [8, 192], strides = [1, 1]} : vector<8x256xf32> to vector<8x192xf32>
    %37 = arith.negf %36 : vector<8x192xf32>
    %38 = math.exp %37 : vector<8x192xf32>
    %cst_16 = arith.constant 1.000000e+00 : f32
    %39 = vector.broadcast %cst_16 : f32 to vector<8x192xf32>
    %40 = arith.addf %39, %38 : vector<8x192xf32>
    %41 = arith.divf %39, %40 : vector<8x192xf32>
    %42 = vector.extract_strided_slice %35 {offsets = [0, 192], sizes = [8, 64], strides = [1, 1]} : vector<8x256xf32> to vector<8x64xf32>
    %43 = math.tanh %42 : vector<8x64xf32>
    %44 = vector.extract_strided_slice %41 {offsets = [0, 64], sizes = [8, 64], strides = [1, 1]} : vector<8x192xf32> to vector<8x64xf32>
    %45 = arith.mulf %44, %26 : vector<8x64xf32>
    %46 = vector.extract_strided_slice %41 {offsets = [0, 0], sizes = [8, 64], strides = [1, 1]} : vector<8x192xf32> to vector<8x64xf32>
    %47 = arith.mulf %46, %43 : vector<8x64xf32>
    %48 = arith.addf %45, %47 : vector<8x64xf32>
    %49 = vector.extract_strided_slice %41 {offsets = [0, 128], sizes = [8, 64], strides = [1, 1]} : vector<8x192xf32> to vector<8x64xf32>
    %50 = math.tanh %48 : vector<8x64xf32>
    %51 = arith.mulf %49, %50 : vector<8x64xf32>
    %52 = vector.shape_cast %51 : vector<8x64xf32> to vector<8x1x64xf32>
    %c0_17 = arith.constant 0 : index
    %c1 = arith.constant 1 : index
    %c0_18 = arith.constant 0 : index
    %53 = vector.load %arg7[%c0_17, %c1, %c0_18] : memref<8x8x64xf32, #tpu.memory_space<vmem>>, vector<8x1x64xf32>
    tpu.vector_store %arg7[%c0_17, %c1, %c0_18], %52 {strides = array<i32>} : memref<8x8x64xf32, #tpu.memory_space<vmem>>, vector<8x1x64xf32>,
    %54 = vector.extract_strided_slice %6 {offsets = [16, 0], sizes = [8, 256], strides = [1, 1]} : vector<64x256xf32> to vector<8x256xf32>
    %55 = arith.truncf %51 : vector<8x64xf32> to vector<8x64xbf16>
    %cst_19 = arith.constant dense<0.000000e+00> : vector<8x256xf32>
    %56 = tpu.matmul %55, %7, %cst_19 {dimension_numbers = #tpu.dot_dimension_numbers<[1], [0], [0], [1], [0, 0, 1, 1], [], []>} : vector<8x64xbf16>, vector<64x256xbf16>, vector<8x256xf32> -> vector<8x256xf32>
    %57 = arith.addf %54, %56 : vector<8x256xf32>
    %58 = vector.extract_strided_slice %57 {offsets = [0, 0], sizes = [8, 192], strides = [1, 1]} : vector<8x256xf32> to vector<8x192xf32>
    %59 = arith.negf %58 : vector<8x192xf32>
    %60 = math.exp %59 : vector<8x192xf32>
    %cst_20 = arith.constant 1.000000e+00 : f32
    %61 = vector.broadcast %cst_20 : f32 to vector<8x192xf32>
    %62 = arith.addf %61, %60 : vector<8x192xf32>
    %63 = arith.divf %61, %62 : vector<8x192xf32>
    %64 = vector.extract_strided_slice %57 {offsets = [0, 192], sizes = [8, 64], strides = [1, 1]} : vector<8x256xf32> to vector<8x64xf32>
    %65 = math.tanh %64 : vector<8x64xf32>
    %66 = vector.extract_strided_slice %63 {offsets = [0, 64], sizes = [8, 64], strides = [1, 1]} : vector<8x192xf32> to vector<8x64xf32>
    %67 = arith.mulf %66, %48 : vector<8x64xf32>
    %68 = vector.extract_strided_slice %63 {offsets = [0, 0], sizes = [8, 64], strides = [1, 1]} : vector<8x192xf32> to vector<8x64xf32>
    %69 = arith.mulf %68, %65 : vector<8x64xf32>
    %70 = arith.addf %67, %69 : vector<8x64xf32>
    %71 = vector.extract_strided_slice %63 {offsets = [0, 128], sizes = [8, 64], strides = [1, 1]} : vector<8x192xf32> to vector<8x64xf32>
    %72 = math.tanh %70 : vector<8x64xf32>
    %73 = arith.mulf %71, %72 : vector<8x64xf32>
    %74 = vector.shape_cast %73 : vector<8x64xf32> to vector<8x1x64xf32>
    %c0_21 = arith.constant 0 : index
    %c2 = arith.constant 2 : index
    %c0_22 = arith.constant 0 : index
    %75 = vector.load %arg7[%c0_21, %c2, %c0_22] : memref<8x8x64xf32, #tpu.memory_space<vmem>>, vector<8x1x64xf32>
    tpu.vector_store %arg7[%c0_21, %c2, %c0_22], %74 {strides = array<i32>} : memref<8x8x64xf32, #tpu.memory_space<vmem>>, vector<8x1x64xf32>,
    %76 = vector.extract_strided_slice %6 {offsets = [24, 0], sizes = [8, 256], strides = [1, 1]} : vector<64x256xf32> to vector<8x256xf32>
    %77 = arith.truncf %73 : vector<8x64xf32> to vector<8x64xbf16>
    %cst_23 = arith.constant dense<0.000000e+00> : vector<8x256xf32>
    %78 = tpu.matmul %77, %7, %cst_23 {dimension_numbers = #tpu.dot_dimension_numbers<[1], [0], [0], [1], [0, 0, 1, 1], [], []>} : vector<8x64xbf16>, vector<64x256xbf16>, vector<8x256xf32> -> vector<8x256xf32>
    %79 = arith.addf %76, %78 : vector<8x256xf32>
    %80 = vector.extract_strided_slice %79 {offsets = [0, 0], sizes = [8, 192], strides = [1, 1]} : vector<8x256xf32> to vector<8x192xf32>
    %81 = arith.negf %80 : vector<8x192xf32>
    %82 = math.exp %81 : vector<8x192xf32>
    %cst_24 = arith.constant 1.000000e+00 : f32
    %83 = vector.broadcast %cst_24 : f32 to vector<8x192xf32>
    %84 = arith.addf %83, %82 : vector<8x192xf32>
    %85 = arith.divf %83, %84 : vector<8x192xf32>
    %86 = vector.extract_strided_slice %79 {offsets = [0, 192], sizes = [8, 64], strides = [1, 1]} : vector<8x256xf32> to vector<8x64xf32>
    %87 = math.tanh %86 : vector<8x64xf32>
    %88 = vector.extract_strided_slice %85 {offsets = [0, 64], sizes = [8, 64], strides = [1, 1]} : vector<8x192xf32> to vector<8x64xf32>
    %89 = arith.mulf %88, %70 : vector<8x64xf32>
    %90 = vector.extract_strided_slice %85 {offsets = [0, 0], sizes = [8, 64], strides = [1, 1]} : vector<8x192xf32> to vector<8x64xf32>
    %91 = arith.mulf %90, %87 : vector<8x64xf32>
    %92 = arith.addf %89, %91 : vector<8x64xf32>
    %93 = vector.extract_strided_slice %85 {offsets = [0, 128], sizes = [8, 64], strides = [1, 1]} : vector<8x192xf32> to vector<8x64xf32>
    %94 = math.tanh %92 : vector<8x64xf32>
    %95 = arith.mulf %93, %94 : vector<8x64xf32>
    %96 = vector.shape_cast %95 : vector<8x64xf32> to vector<8x1x64xf32>
    %c0_25 = arith.constant 0 : index
    %c3 = arith.constant 3 : index
    %c0_26 = arith.constant 0 : index
    %97 = vector.load %arg7[%c0_25, %c3, %c0_26] : memref<8x8x64xf32, #tpu.memory_space<vmem>>, vector<8x1x64xf32>
    tpu.vector_store %arg7[%c0_25, %c3, %c0_26], %96 {strides = array<i32>} : memref<8x8x64xf32, #tpu.memory_space<vmem>>, vector<8x1x64xf32>,
    %98 = vector.extract_strided_slice %6 {offsets = [32, 0], sizes = [8, 256], strides = [1, 1]} : vector<64x256xf32> to vector<8x256xf32>
    %99 = arith.truncf %95 : vector<8x64xf32> to vector<8x64xbf16>
    %cst_27 = arith.constant dense<0.000000e+00> : vector<8x256xf32>
    %100 = tpu.matmul %99, %7, %cst_27 {dimension_numbers = #tpu.dot_dimension_numbers<[1], [0], [0], [1], [0, 0, 1, 1], [], []>} : vector<8x64xbf16>, vector<64x256xbf16>, vector<8x256xf32> -> vector<8x256xf32>
    %101 = arith.addf %98, %100 : vector<8x256xf32>
    %102 = vector.extract_strided_slice %101 {offsets = [0, 0], sizes = [8, 192], strides = [1, 1]} : vector<8x256xf32> to vector<8x192xf32>
    %103 = arith.negf %102 : vector<8x192xf32>
    %104 = math.exp %103 : vector<8x192xf32>
    %cst_28 = arith.constant 1.000000e+00 : f32
    %105 = vector.broadcast %cst_28 : f32 to vector<8x192xf32>
    %106 = arith.addf %105, %104 : vector<8x192xf32>
    %107 = arith.divf %105, %106 : vector<8x192xf32>
    %108 = vector.extract_strided_slice %101 {offsets = [0, 192], sizes = [8, 64], strides = [1, 1]} : vector<8x256xf32> to vector<8x64xf32>
    %109 = math.tanh %108 : vector<8x64xf32>
    %110 = vector.extract_strided_slice %107 {offsets = [0, 64], sizes = [8, 64], strides = [1, 1]} : vector<8x192xf32> to vector<8x64xf32>
    %111 = arith.mulf %110, %92 : vector<8x64xf32>
    %112 = vector.extract_strided_slice %107 {offsets = [0, 0], sizes = [8, 64], strides = [1, 1]} : vector<8x192xf32> to vector<8x64xf32>
    %113 = arith.mulf %112, %109 : vector<8x64xf32>
    %114 = arith.addf %111, %113 : vector<8x64xf32>
    %115 = vector.extract_strided_slice %107 {offsets = [0, 128], sizes = [8, 64], strides = [1, 1]} : vector<8x192xf32> to vector<8x64xf32>
    %116 = math.tanh %114 : vector<8x64xf32>
    %117 = arith.mulf %115, %116 : vector<8x64xf32>
    %118 = vector.shape_cast %117 : vector<8x64xf32> to vector<8x1x64xf32>
    %c0_29 = arith.constant 0 : index
    %c4 = arith.constant 4 : index
    %c0_30 = arith.constant 0 : index
    %119 = vector.load %arg7[%c0_29, %c4, %c0_30] : memref<8x8x64xf32, #tpu.memory_space<vmem>>, vector<8x1x64xf32>
    tpu.vector_store %arg7[%c0_29, %c4, %c0_30], %118 {strides = array<i32>} : memref<8x8x64xf32, #tpu.memory_space<vmem>>, vector<8x1x64xf32>,
    %120 = vector.extract_strided_slice %6 {offsets = [40, 0], sizes = [8, 256], strides = [1, 1]} : vector<64x256xf32> to vector<8x256xf32>
    %121 = arith.truncf %117 : vector<8x64xf32> to vector<8x64xbf16>
    %cst_31 = arith.constant dense<0.000000e+00> : vector<8x256xf32>
    %122 = tpu.matmul %121, %7, %cst_31 {dimension_numbers = #tpu.dot_dimension_numbers<[1], [0], [0], [1], [0, 0, 1, 1], [], []>} : vector<8x64xbf16>, vector<64x256xbf16>, vector<8x256xf32> -> vector<8x256xf32>
    %123 = arith.addf %120, %122 : vector<8x256xf32>
    %124 = vector.extract_strided_slice %123 {offsets = [0, 0], sizes = [8, 192], strides = [1, 1]} : vector<8x256xf32> to vector<8x192xf32>
    %125 = arith.negf %124 : vector<8x192xf32>
    %126 = math.exp %125 : vector<8x192xf32>
    %cst_32 = arith.constant 1.000000e+00 : f32
    %127 = vector.broadcast %cst_32 : f32 to vector<8x192xf32>
    %128 = arith.addf %127, %126 : vector<8x192xf32>
    %129 = arith.divf %127, %128 : vector<8x192xf32>
    %130 = vector.extract_strided_slice %123 {offsets = [0, 192], sizes = [8, 64], strides = [1, 1]} : vector<8x256xf32> to vector<8x64xf32>
    %131 = math.tanh %130 : vector<8x64xf32>
    %132 = vector.extract_strided_slice %129 {offsets = [0, 64], sizes = [8, 64], strides = [1, 1]} : vector<8x192xf32> to vector<8x64xf32>
    %133 = arith.mulf %132, %114 : vector<8x64xf32>
    %134 = vector.extract_strided_slice %129 {offsets = [0, 0], sizes = [8, 64], strides = [1, 1]} : vector<8x192xf32> to vector<8x64xf32>
    %135 = arith.mulf %134, %131 : vector<8x64xf32>
    %136 = arith.addf %133, %135 : vector<8x64xf32>
    %137 = vector.extract_strided_slice %129 {offsets = [0, 128], sizes = [8, 64], strides = [1, 1]} : vector<8x192xf32> to vector<8x64xf32>
    %138 = math.tanh %136 : vector<8x64xf32>
    %139 = arith.mulf %137, %138 : vector<8x64xf32>
    %140 = vector.shape_cast %139 : vector<8x64xf32> to vector<8x1x64xf32>
    %c0_33 = arith.constant 0 : index
    %c5 = arith.constant 5 : index
    %c0_34 = arith.constant 0 : index
    %141 = vector.load %arg7[%c0_33, %c5, %c0_34] : memref<8x8x64xf32, #tpu.memory_space<vmem>>, vector<8x1x64xf32>
    tpu.vector_store %arg7[%c0_33, %c5, %c0_34], %140 {strides = array<i32>} : memref<8x8x64xf32, #tpu.memory_space<vmem>>, vector<8x1x64xf32>,
    %142 = vector.extract_strided_slice %6 {offsets = [48, 0], sizes = [8, 256], strides = [1, 1]} : vector<64x256xf32> to vector<8x256xf32>
    %143 = arith.truncf %139 : vector<8x64xf32> to vector<8x64xbf16>
    %cst_35 = arith.constant dense<0.000000e+00> : vector<8x256xf32>
    %144 = tpu.matmul %143, %7, %cst_35 {dimension_numbers = #tpu.dot_dimension_numbers<[1], [0], [0], [1], [0, 0, 1, 1], [], []>} : vector<8x64xbf16>, vector<64x256xbf16>, vector<8x256xf32> -> vector<8x256xf32>
    %145 = arith.addf %142, %144 : vector<8x256xf32>
    %146 = vector.extract_strided_slice %145 {offsets = [0, 0], sizes = [8, 192], strides = [1, 1]} : vector<8x256xf32> to vector<8x192xf32>
    %147 = arith.negf %146 : vector<8x192xf32>
    %148 = math.exp %147 : vector<8x192xf32>
    %cst_36 = arith.constant 1.000000e+00 : f32
    %149 = vector.broadcast %cst_36 : f32 to vector<8x192xf32>
    %150 = arith.addf %149, %148 : vector<8x192xf32>
    %151 = arith.divf %149, %150 : vector<8x192xf32>
    %152 = vector.extract_strided_slice %145 {offsets = [0, 192], sizes = [8, 64], strides = [1, 1]} : vector<8x256xf32> to vector<8x64xf32>
    %153 = math.tanh %152 : vector<8x64xf32>
    %154 = vector.extract_strided_slice %151 {offsets = [0, 64], sizes = [8, 64], strides = [1, 1]} : vector<8x192xf32> to vector<8x64xf32>
    %155 = arith.mulf %154, %136 : vector<8x64xf32>
    %156 = vector.extract_strided_slice %151 {offsets = [0, 0], sizes = [8, 64], strides = [1, 1]} : vector<8x192xf32> to vector<8x64xf32>
    %157 = arith.mulf %156, %153 : vector<8x64xf32>
    %158 = arith.addf %155, %157 : vector<8x64xf32>
    %159 = vector.extract_strided_slice %151 {offsets = [0, 128], sizes = [8, 64], strides = [1, 1]} : vector<8x192xf32> to vector<8x64xf32>
    %160 = math.tanh %158 : vector<8x64xf32>
    %161 = arith.mulf %159, %160 : vector<8x64xf32>
    %162 = vector.shape_cast %161 : vector<8x64xf32> to vector<8x1x64xf32>
    %c0_37 = arith.constant 0 : index
    %c6 = arith.constant 6 : index
    %c0_38 = arith.constant 0 : index
    %163 = vector.load %arg7[%c0_37, %c6, %c0_38] : memref<8x8x64xf32, #tpu.memory_space<vmem>>, vector<8x1x64xf32>
    tpu.vector_store %arg7[%c0_37, %c6, %c0_38], %162 {strides = array<i32>} : memref<8x8x64xf32, #tpu.memory_space<vmem>>, vector<8x1x64xf32>,
    %164 = vector.extract_strided_slice %6 {offsets = [56, 0], sizes = [8, 256], strides = [1, 1]} : vector<64x256xf32> to vector<8x256xf32>
    %165 = arith.truncf %161 : vector<8x64xf32> to vector<8x64xbf16>
    %cst_39 = arith.constant dense<0.000000e+00> : vector<8x256xf32>
    %166 = tpu.matmul %165, %7, %cst_39 {dimension_numbers = #tpu.dot_dimension_numbers<[1], [0], [0], [1], [0, 0, 1, 1], [], []>} : vector<8x64xbf16>, vector<64x256xbf16>, vector<8x256xf32> -> vector<8x256xf32>
    %167 = arith.addf %164, %166 : vector<8x256xf32>
    %168 = vector.extract_strided_slice %167 {offsets = [0, 0], sizes = [8, 192], strides = [1, 1]} : vector<8x256xf32> to vector<8x192xf32>
    %169 = arith.negf %168 : vector<8x192xf32>
    %170 = math.exp %169 : vector<8x192xf32>
    %cst_40 = arith.constant 1.000000e+00 : f32
    %171 = vector.broadcast %cst_40 : f32 to vector<8x192xf32>
    %172 = arith.addf %171, %170 : vector<8x192xf32>
    %173 = arith.divf %171, %172 : vector<8x192xf32>
    %174 = vector.extract_strided_slice %167 {offsets = [0, 192], sizes = [8, 64], strides = [1, 1]} : vector<8x256xf32> to vector<8x64xf32>
    %175 = math.tanh %174 : vector<8x64xf32>
    %176 = vector.extract_strided_slice %173 {offsets = [0, 64], sizes = [8, 64], strides = [1, 1]} : vector<8x192xf32> to vector<8x64xf32>
    %177 = arith.mulf %176, %158 : vector<8x64xf32>
    %178 = vector.extract_strided_slice %173 {offsets = [0, 0], sizes = [8, 64], strides = [1, 1]} : vector<8x192xf32> to vector<8x64xf32>
    %179 = arith.mulf %178, %175 : vector<8x64xf32>
    %180 = arith.addf %177, %179 : vector<8x64xf32>
    %181 = vector.extract_strided_slice %173 {offsets = [0, 128], sizes = [8, 64], strides = [1, 1]} : vector<8x192xf32> to vector<8x64xf32>
    %182 = math.tanh %180 : vector<8x64xf32>
    %183 = arith.mulf %181, %182 : vector<8x64xf32>
    %184 = vector.shape_cast %183 : vector<8x64xf32> to vector<8x1x64xf32>
    %c0_41 = arith.constant 0 : index
    %c7 = arith.constant 7 : index
    %c0_42 = arith.constant 0 : index
    %185 = vector.load %arg7[%c0_41, %c7, %c0_42] : memref<8x8x64xf32, #tpu.memory_space<vmem>>, vector<8x1x64xf32>
    tpu.vector_store %arg7[%c0_41, %c7, %c0_42], %184 {strides = array<i32>} : memref<8x8x64xf32, #tpu.memory_space<vmem>>, vector<8x1x64xf32>,
    %c0_43 = arith.constant 0 : index
    %c0_44 = arith.constant 0 : index
    %c0_45 = arith.constant 0 : index
    %186 = vector.load %arg7[%c0_43, %c0_44, %c0_45] : memref<8x8x64xf32, #tpu.memory_space<vmem>>, vector<8x8x64xf32>
    %187 = vector.extract_strided_slice %186 {offsets = [0, 0, 0], sizes = [8, 8, 32], strides = [1, 1, 1]} : vector<8x8x64xf32> to vector<8x8x32xf32>
    %188 = arith.truncf %187 : vector<8x8x32xf32> to vector<8x8x32xbf16>
    %189 = vector.extract_strided_slice %186 {offsets = [0, 0, 32], sizes = [8, 8, 32], strides = [1, 1, 1]} : vector<8x8x64xf32> to vector<8x8x32xf32>
    %190 = arith.truncf %189 : vector<8x8x32xf32> to vector<8x8x32xbf16>
    %cst_46 = arith.constant dense<0.000000e+00> : vector<8x8x8xf32>
    %191 = tpu.matmul %188, %190, %cst_46 {dimension_numbers = #tpu.dot_dimension_numbers<[2], [2], [1], [1], [0, 0, 0, 1, 1, 1], [0], [0]>} : vector<8x8x32xbf16>, vector<8x8x32xbf16>, vector<8x8x8xf32> -> vector<8x8x8xf32>
    %c0_47 = arith.constant 0 : index
    %c0_48 = arith.constant 0 : index
    %c0_49 = arith.constant 0 : index
    %192 = vector.load %arg5[%c0_47, %c0_48, %c0_49] : memref<8x8x8xf32, #tpu.memory_space<vmem>>, vector<8x8x8xf32>
    tpu.vector_store %arg5[%c0_47, %c0_48, %c0_49], %191 {strides = array<i32>} : memref<8x8x8xf32, #tpu.memory_space<vmem>>, vector<8x8x8xf32>,
    return
  }
  func.func @transform_0(%arg0: i32) -> (i32, i32, i32) {
    %c0_i32 = arith.constant 0 : i32
    %c0_i32_0 = arith.constant 0 : i32
    %c0_i32_1 = arith.constant 0 : i32
    return %c0_i32, %arg0, %c0_i32_0 : i32, i32, i32
  }
  func.func @transform_1(%arg0: i32) -> (i32, i32) {
    %c0_i32 = arith.constant 0 : i32
    %c0_i32_0 = arith.constant 0 : i32
    %c0_i32_1 = arith.constant 0 : i32
    return %c0_i32, %c0_i32_0 : i32, i32
  }
  func.func @transform_2(%arg0: i32) -> (i32, i32) {
    %c0_i32 = arith.constant 0 : i32
    %c0_i32_0 = arith.constant 0 : i32
    %c0_i32_1 = arith.constant 0 : i32
    return %c0_i32, %c0_i32_0 : i32, i32
  }
  func.func @transform_3(%arg0: i32) -> (i32, i32) {
    %c0_i32 = arith.constant 0 : i32
    %c0_i32_0 = arith.constant 0 : i32
    %c0_i32_1 = arith.constant 0 : i32
    return %c0_i32, %c0_i32_0 : i32, i32
  }
  func.func @transform_4(%arg0: i32) -> (i32, i32, i32) {
    %c0_i32 = arith.constant 0 : i32
    %c0_i32_0 = arith.constant 0 : i32
    %c0_i32_1 = arith.constant 0 : i32
    return %arg0, %c0_i32, %c0_i32_0 : i32, i32, i32
  }
}

</mosaic_0001>

<llo_original>
// kernel: tpu_custom_call.1
$region0: #{tpu_custom_call.1}
  #allocation0 [shape = 'u32[]', space=smem, size = 0x4, offset = 0x4, fixed_abs, tag = 'smem constant byte address 0x4 - core index']
  #allocation1 [shape = 'u32[144,128]{1,0:T(1,128)}', space=vmem, size = 0x12000, scoped, tag = 'internal scratch']
  #allocation2 [shape = 'f32[8,8,256]{2,1,0:T(8,128)}', space=vmem, size = 0x10000, scoped, tag = 'scratch operand']
  #allocation3 [shape = 'f32[8,8,64]{2,1,0:T(8,128)}', space=vmem, size = 0x8000, scoped, tag = 'scratch operand']
  %s0 = inlined_call_operand.hbm [shape: bf16[8,8,32], index: 0, kind: input, shape index: {}]
  %s1 = inlined_call_operand.hbm [shape: bf16[32,256], index: 1, kind: input, shape index: {}]
  %s2 = inlined_call_operand.vmem [shape: f32[1,256], index: 2, kind: input, shape index: {}]
  %s3 = inlined_call_operand.hbm [shape: bf16[64,256], index: 3, kind: input, shape index: {}]
  %s4 = inlined_call_operand.hbm [shape: f32[8,8,8], index: 4, kind: output, shape index: {}]
  %s5 = sld [smem:[#allocation0]]
  $region38: #{tpu_custom_call.1} parent=0
    _
  %s7 = ssub.s32 1, %s5
  %s8 = scalar_select 0, %s7, %s5
  $region1: #{tpu_custom_call.1} parent=0
    #allocation4 [shape = 'u8[16384]{0}', space=vmem, size = 0x4000, scoped, tag = 'input window, operand 0, single buffered']
    #allocation5 [shape = 's32[1]{0}', space=sflag, size = 0x4, scoped, tag = 'scoped memory for tpu_custom_call.1']
    #allocation6 [shape = 's32[1]{0}', space=sflag, size = 0x4, scoped, tag = 'scoped memory for tpu_custom_call.1']
    #allocation7 [shape = 'u8[16384]{0}', space=vmem, size = 0x4000, scoped, tag = 'input window, operand 1, single buffered']
    #allocation8 [shape = 's32[1]{0}', space=sflag, size = 0x4, scoped, tag = 'scoped memory for tpu_custom_call.1']
    #allocation9 [shape = 'u8[32768]{0}', space=vmem, size = 0x8000, scoped, tag = 'input window, operand 3, single buffered']
    #allocation10 [shape = 'u8[32768]{0}', space=vmem, size = 0x8000, scoped, tag = 'output window, operand 0, single buffered']
    %9 = vsyncpa [#allocation5], 0
    %10 = vsyncpa [#allocation8], 0
    %11 = vsyncpa [#allocation6], 0
    // Predicated region
    $region2: #{tpu_custom_call.1} parent=1 // pred_check
      _
    $region3: #{tpu_custom_call.1} parent=1 // pred_check_branch
      %13 = sbr.rel (0) target = $region5
    $region4: #{tpu_custom_call.1} parent=1 // pred_region
      %s15 = ssub.s32 512, 512
      %16 = vsyncadd [#allocation5], %s15
      %s17 = sshll.u32 [#allocation4], 4
      %s18 = int_to_ptr.vmem [resolvable:$true] %s17
      %23 = dma.hbm_to_vmem [thread:$0]  %s0, 512, %s18, [#allocation5], 64, 64, 4
    $region5: #{tpu_custom_call.1} parent=1 // pred_fallthru
      _
    // Predicated region
    $region6: #{tpu_custom_call.1} parent=1 // pred_check
      _
    $region7: #{tpu_custom_call.1} parent=1 // pred_check_branch
      %25 = sbr.rel (0) target = $region9
    $region8: #{tpu_custom_call.1} parent=1 // pred_region
      %s27 = ssub.s32 512, 512
      %28 = vsyncadd [#allocation8], %s27
      %s29 = sshll.u32 [#allocation7], 4
      %s30 = int_to_ptr.vmem [resolvable:$true] %s29
      %35 = dma.hbm_to_vmem [thread:$0]  %s1, 512, %s30, [#allocation8], 128, 128, 8
    $region9: #{tpu_custom_call.1} parent=1 // pred_fallthru
      _
    // Predicated region
    $region10: #{tpu_custom_call.1} parent=1 // pred_check
      _
    $region11: #{tpu_custom_call.1} parent=1 // pred_check_branch
      %37 = sbr.rel (0) target = $region13
    $region12: #{tpu_custom_call.1} parent=1 // pred_region
      _
    $region13: #{tpu_custom_call.1} parent=1 // pred_fallthru
      _
    // Predicated region
    $region14: #{tpu_custom_call.1} parent=1 // pred_check
      _
    $region15: #{tpu_custom_call.1} parent=1 // pred_check_branch
      %39 = sbr.rel (0) target = $region17
    $region16: #{tpu_custom_call.1} parent=1 // pred_region
      %s41 = ssub.s32 1024, 1024
      %42 = vsyncadd [#allocation8], %s41
      %s43 = sshll.u32 [#allocation9], 4
      %s44 = int_to_ptr.vmem [resolvable:$true] %s43
      %49 = dma.hbm_to_vmem [thread:$0]  %s3, 1024, %s44, [#allocation8], 128, 128, 8
    $region17: #{tpu_custom_call.1} parent=1 // pred_fallthru
      _
    // Predicated region
    $region18: #{tpu_custom_call.1} parent=1 // pred_check
      _
    $region19: #{tpu_custom_call.1} parent=1 // pred_check_branch
      %51 = sbr.rel (0) target = $region21
    $region20: #{tpu_custom_call.1} parent=1 // pred_region
      %52 = dma.done [#allocation5], 512
    $region21: #{tpu_custom_call.1} parent=1 // pred_fallthru
      _
    // Predicated region
    $region22: #{tpu_custom_call.1} parent=1 // pred_check
      _
    $region23: #{tpu_custom_call.1} parent=1 // pred_check_branch
      %54 = sbr.rel (0) target = $region25
    $region24: #{tpu_custom_call.1} parent=1 // pred_region
      %55 = dma.done [#allocation8], 512
    $region25: #{tpu_custom_call.1} parent=1 // pred_fallthru
      _
    // Predicated region
    $region26: #{tpu_custom_call.1} parent=1 // pred_check
      _
    $region27: #{tpu_custom_call.1} parent=1 // pred_check_branch
      %57 = sbr.rel (0) target = $region29
    $region28: #{tpu_custom_call.1} parent=1 // pred_region
      %58 = dma.done [#allocation8], 1024
    $region29: #{tpu_custom_call.1} parent=1 // pred_fallthru
      _
    %v60 = vld [vmem:[#allocation4] sm:$0xf]
    %v61 = vld [vmem:[#allocation4 + $0x4] sm:$0xf]
    %v62 = vld [vmem:[#allocation4 + $0x8] sm:$0xf]
    %v63 = vld [vmem:[#allocation4 + $0xc] sm:$0xf]
    %v64 = vld [vmem:[#allocation4 + $0x10] sm:$0xf]
    %v65 = vld [vmem:[#allocation4 + $0x14] sm:$0xf]
    %v66 = vld [vmem:[#allocation4 + $0x18] sm:$0xf]
    %v67 = vld [vmem:[#allocation4 + $0x1c] sm:$0xf]
    %v68 = vld [vmem:[#allocation7] sm:$0xff]
    %v69 = vld [vmem:[#allocation7 + $0x8] sm:$0xff]
    %v70 = vld [vmem:[#allocation7 + $0x10] sm:$0xff]
    %v71 = vld [vmem:[#allocation7 + $0x18] sm:$0xff]
    %v72 = vld [vmem:[%s2] sm:$0x3]
    %v74 = vlaneseq
    %v75 = vshrl.u32 %v74, 7
    %v76 = vsub.s32 0, %v75
    %v77 = vrot.slane %v72, %v76
    %v78 = vlaneseq
    %v79 = vshrl.u32 %v78, 7
    %v80 = vsub.s32 1, %v79
    %v81 = vrot.slane %v72, %v80
    %v92 = vunpack.c.l.b16 %v60
    %v93 = vunpack.c.l.b16 %v61
    %v94 = vunpack.c.l.b16 %v62
    %v95 = vunpack.c.l.b16 %v63
    %v96 = vunpack.c.l.b16 %v64
    %v97 = vunpack.c.l.b16 %v65
    %v98 = vunpack.c.l.b16 %v66
    %v99 = vunpack.c.l.b16 %v67
    %v100 = vpack.c.b16 %v93, %v92
    %v101 = vpack.c.b16 %v95, %v94
    %v102 = vpack.c.b16 %v97, %v96
    %v103 = vpack.c.b16 %v99, %v98
    %v108 = vunpack.c.l.b16 %v68
    %v109 = vunpack.c.h.b16 %v68
    %v110 = vunpack.c.l.b16 %v69
    %v111 = vunpack.c.h.b16 %v69
    %v112 = vunpack.c.l.b16 %v70
    %v113 = vunpack.c.h.b16 %v70
    %v114 = vunpack.c.l.b16 %v71
    %v115 = vunpack.c.h.b16 %v71
    %v116 = vpack.c.b16 %v110, %v108
    %v117 = vpack.c.b16 %v111, %v109
    %v118 = vpack.c.b16 %v114, %v112
    %v119 = vpack.c.b16 %v115, %v113
    %vm124 = vcmask 261120
    %v126 = vsel %vm124, %v100, 0
    %v129 = vsel %vm124, %v101, 0
    %v132 = vsel %vm124, %v102, 0
    %v135 = vsel %vm124, %v103, 0
    %137 = vmatprep.subr.bf16.mxu0 %v117
    %138 = vmatpush1.bf16.msra.mxu0 %v116
    %139 = vmatprep.subr.bf16.mxu0 %v119
    %140 = vmatpush1.bf16.msra.mxu0 %v118
    %141 = vmatprep.subr.bf16.mxu0 0
    %142 = vmatpush1.bf16.msra.mxu0 0
    %143 = vmatprep.subr.bf16.mxu0 0
    %144 = vmatpush1.bf16.msra.mxu0 0
    %145 = vmatprep.subr.bf16.mxu0 0
    %146 = vmatpush1.bf16.msra.mxu0 0
    %147 = vmatprep.subr.bf16.mxu0 0
    %148 = vmatpush1.bf16.msra.mxu0 0
    %149 = vmatprep.subr.bf16.mxu0 0
    %150 = vmatpush1.bf16.msra.mxu0 0
    %151 = vmatprep.subr.bf16.mxu0 0
    %152 = vmatpush1.bf16.msra.mxu0 0
    %153 = vmatprep.subr.bf16.mxu0 0
    %154 = vmatpush1.bf16.msra.mxu0 0
    %155 = vmatprep.subr.bf16.mxu0 0
    %156 = vmatpush1.bf16.msra.mxu0 0
    %157 = vmatprep.subr.bf16.mxu0 0
    %158 = vmatpush1.bf16.msra.mxu0 0
    %159 = vmatprep.subr.bf16.mxu0 0
    %160 = vmatpush1.bf16.msra.mxu0 0
    %161 = vmatprep.subr.bf16.mxu0 0
    %162 = vmatpush1.bf16.msra.mxu0 0
    %163 = vmatprep.subr.bf16.mxu0 0
    %164 = vmatpush1.bf16.msra.mxu0 0
    %165 = vmatprep.subr.bf16.mxu0 0
    %166 = vmatpush1.bf16.msra.mxu0 0
    %167 = vmatprep.subr.bf16.mxu0 0
    %168 = vmatpush1.bf16.msra.mxu0 0
    %169 = vmatprep.mubr.bf16.mxu0 0
    %170 = vmatmul.mubr.bf16.gmra.mrb[0].mxu0 %v126
    %v171 = vpop.f32.mrb[0].mxu0
    %v172 = vadd.f32 %v77, %v171
    %v173 = vpop.f32.mrb[0].mxu0
    %v174 = vadd.f32 %v81, %v173
    %v175 = vpop.f32.mrb[0].mxu0
    %v176 = vadd.f32 %v77, %v175
    %v177 = vpop.f32.mrb[0].mxu0
    %v178 = vadd.f32 %v81, %v177
    %179 = vmatprep.mubr.bf16.mxu0 0
    %180 = vmatmul.mubr.bf16.gmra.mrb[0].mxu0 %v129
    %v181 = vpop.f32.mrb[0].mxu0
    %v182 = vadd.f32 %v77, %v181
    %v183 = vpop.f32.mrb[0].mxu0
    %v184 = vadd.f32 %v81, %v183
    %v185 = vpop.f32.mrb[0].mxu0
    %v186 = vadd.f32 %v77, %v185
    %v187 = vpop.f32.mrb[0].mxu0
    %v188 = vadd.f32 %v81, %v187
    %189 = vmatprep.mubr.bf16.mxu0 0
    %190 = vmatmul.mubr.bf16.gmra.mrb[0].mxu0 %v132
    %v191 = vpop.f32.mrb[0].mxu0
    %v192 = vadd.f32 %v77, %v191
    %v193 = vpop.f32.mrb[0].mxu0
    %v194 = vadd.f32 %v81, %v193
    %v195 = vpop.f32.mrb[0].mxu0
    %v196 = vadd.f32 %v77, %v195
    %v197 = vpop.f32.mrb[0].mxu0
    %v198 = vadd.f32 %v81, %v197
    %199 = vmatprep.mubr.bf16.mxu0 0
    %200 = vmatmul.mubr.bf16.gmra.mrb[0].mxu0 %v135
    %v201 = vpop.f32.mrb[0].mxu0
    %v202 = vadd.f32 %v77, %v201
    %v203 = vpop.f32.mrb[0].mxu0
    %v204 = vadd.f32 %v81, %v203
    %v205 = vpop.f32.mrb[0].mxu0
    %v206 = vadd.f32 %v77, %v205
    %v207 = vpop.f32.mrb[0].mxu0
    %v208 = vadd.f32 %v81, %v207
    %209 = vdwg.mxu0
    %v210 = vld [vmem:[#allocation9] sm:$0xff]
    %v211 = vld [vmem:[#allocation9 + $0x8] sm:$0xff]
    %v212 = vld [vmem:[#allocation9 + $0x10] sm:$0xff]
    %v213 = vld [vmem:[#allocation9 + $0x18] sm:$0xff]
    %v214 = vld [vmem:[#allocation9 + $0x20] sm:$0xff]
    %v215 = vld [vmem:[#allocation9 + $0x28] sm:$0xff]
    %v216 = vld [vmem:[#allocation9 + $0x30] sm:$0xff]
    %v217 = vld [vmem:[#allocation9 + $0x38] sm:$0xff]
    %v226 = vunpack.c.l.b16 %v210
    %v227 = vunpack.c.h.b16 %v210
    %v228 = vunpack.c.l.b16 %v211
    %v229 = vunpack.c.h.b16 %v211
    %v230 = vunpack.c.l.b16 %v212
    %v231 = vunpack.c.h.b16 %v212
    %v232 = vunpack.c.l.b16 %v213
    %v233 = vunpack.c.h.b16 %v213
    %v234 = vunpack.c.l.b16 %v214
    %v235 = vunpack.c.h.b16 %v214
    %v236 = vunpack.c.l.b16 %v215
    %v237 = vunpack.c.h.b16 %v215
    %v238 = vunpack.c.l.b16 %v216
    %v239 = vunpack.c.h.b16 %v216
    %v240 = vunpack.c.l.b16 %v217
    %v241 = vunpack.c.h.b16 %v217
    %v242 = vpack.c.b16 %v228, %v226
    %v243 = vpack.c.b16 %v229, %v227
    %v244 = vpack.c.b16 %v232, %v230
    %v245 = vpack.c.b16 %v233, %v231
    %v246 = vpack.c.b16 %v236, %v234
    %v247 = vpack.c.b16 %v237, %v235
    %v248 = vpack.c.b16 %v240, %v238
    %v249 = vpack.c.b16 %v241, %v239
    %vm258 = vcmask 523264
    %v260 = vsel %vm258, 0, 0
    %262 = vmatprep.subr.bf16.mxu0 %v243
    %263 = vmatpush1.bf16.msra.mxu0 %v242
    %264 = vmatprep.subr.bf16.mxu0 %v245
    %265 = vmatpush1.bf16.msra.mxu0 %v244
    %266 = vmatprep.subr.bf16.mxu0 %v247
    %267 = vmatpush1.bf16.msra.mxu0 %v246
    %268 = vmatprep.subr.bf16.mxu0 %v249
    %269 = vmatpush1.bf16.msra.mxu0 %v248
    %270 = vmatprep.subr.bf16.mxu0 0
    %271 = vmatpush1.bf16.msra.mxu0 0
    %272 = vmatprep.subr.bf16.mxu0 0
    %273 = vmatpush1.bf16.msra.mxu0 0
    %274 = vmatprep.subr.bf16.mxu0 0
    %275 = vmatpush1.bf16.msra.mxu0 0
    %276 = vmatprep.subr.bf16.mxu0 0
    %277 = vmatpush1.bf16.msra.mxu0 0
    %278 = vmatprep.subr.bf16.mxu0 0
    %279 = vmatpush1.bf16.msra.mxu0 0
    %280 = vmatprep.subr.bf16.mxu0 0
    %281 = vmatpush1.bf16.msra.mxu0 0
    %282 = vmatprep.subr.bf16.mxu0 0
    %283 = vmatpush1.bf16.msra.mxu0 0
    %284 = vmatprep.subr.bf16.mxu0 0
    %285 = vmatpush1.bf16.msra.mxu0 0
    %286 = vmatprep.subr.bf16.mxu0 0
    %287 = vmatpush1.bf16.msra.mxu0 0
    %288 = vmatprep.subr.bf16.mxu0 0
    %289 = vmatpush1.bf16.msra.mxu0 0
    %290 = vmatprep.subr.bf16.mxu0 0
    %291 = vmatpush1.bf16.msra.mxu0 0
    %292 = vmatprep.subr.bf16.mxu0 0
    %293 = vmatpush1.bf16.msra.mxu0 0
    %294 = vmatprep.mubr.bf16.mxu0 0
    %295 = vmatmul.mubr.bf16.gmra.mrb[0].mxu0 %v260
    %v296 = vpop.f32.mrb[0].mxu0
    %v297 = vadd.f32 0.0, %v296
    %v298 = vpop.f32.mrb[0].mxu0
    %v299 = vadd.f32 0.0, %v298
    %v300 = vpop.f32.mrb[0].mxu0
    %v301 = vpop.f32.mrb[0].mxu0
    %302 = vdwg.mxu0
    %v303 = vadd.f32 %v172, %v297
    %v304 = vadd.f32 %v174, %v299
    %v305 = vxor.u32 %v303, 2147483648
    %v306 = vxor.u32 %v304, 2147483648
    %v307 = vmul.f32 %v305, 1.442695
    %v308 = vpow.pop %v307
    %v309 = vmul.f32 %v306, 1.442695
    %v310 = vpow.pop %v309
    %v311 = vadd.f32 %v308, 1.0
    %v312 = vadd.f32 %v310, 1.0
    %v313 = vrcp.pop %v311
    %v314 = vmul.f32 1.0, %v313
    %v315 = vrcp.pop %v312
    %v316 = vmul.f32 1.0, %v315
    %v317 = vtanh.pop %v304
    %v318 = vmul.f32 %v314, 0.0
    %320 = vrot.lane.b32.xlu0 %v317, 64
    %v321 = vpop.permute.xlu0 %320
    %v323 = vmul.f32 %v314, %v321
    %325 = vrot.lane.b32.xlu0 %v323, 64
    %v326 = vpop.permute.xlu0 %325
    %v328 = vadd.f32 %v318, %v326
    %v329 = vtanh.pop %v328
    %331 = vrot.lane.b32.xlu0 %v329, 64
    %v332 = vpop.permute.xlu0 %331
    %v334 = vmul.f32 %v316, %v332
    %v336 = vcombine.high %v334, %v334
    %v338 = vunpack.c.l.s4 1966171168
    %v339 = vunpack.c.0.s8 %v338
    %v340 = vlaneseq
    %v341 = vshrl.u32 %v340, 7
    %v342 = vsub.s32 %v339, %v341
    %v343 = vrot.slane %v334, %v342
    %v345 = vunpack.c.l.s4 1966171168
    %v346 = vunpack.c.0.s8 %v345
    %v347 = vlaneseq
    %v348 = vshrl.u32 %v347, 7
    %v349 = vsub.s32 %v346, %v348
    %v350 = vrot.slane %v336, %v349
    %v351 = vcombine.high %v343, %v343
    %v352 = vcombine.high %v350, %v350
    %v354 = vunpack.c.l.s4 1966171168
    %v355 = vunpack.c.0.s8 %v354
    %v356 = vlaneseq
    %v357 = vshrl.u32 %v356, 7
    %v358 = vsub.s32 %v355, %v357
    %v359 = vrot.slane %v343, %v358
    %v361 = vunpack.c.l.s4 1966171168
    %v362 = vunpack.c.0.s8 %v361
    %v363 = vlaneseq
    %v364 = vshrl.u32 %v363, 7
    %v365 = vsub.s32 %v362, %v364
    %v366 = vrot.slane %v350, %v365
    %v368 = vunpack.c.l.s4 1966171168
    %v369 = vunpack.c.0.s8 %v368
    %v370 = vlaneseq
    %v371 = vshrl.u32 %v370, 7
    %v372 = vsub.s32 %v369, %v371
    %v373 = vrot.slane %v351, %v372
    %v375 = vunpack.c.l.s4 1966171168
    %v376 = vunpack.c.0.s8 %v375
    %v377 = vlaneseq
    %v378 = vshrl.u32 %v377, 7
    %v379 = vsub.s32 %v376, %v378
    %v380 = vrot.slane %v352, %v379
    %v381 = vcombine.high %v359, %v359
    %v382 = vcombine.high %v366, %v366
    %v383 = vcombine.high %v373, %v373
    %v384 = vcombine.high %v380, %v380
    %vm393 = vcmask 516096
    %394 = vst.msk [vmem:[#allocation3] sm:$0x1] %vm393, %v359
    %395 = vst.msk [vmem:[#allocation3 + $0x8] sm:$0x1] %vm393, %v373
    %396 = vst.msk [vmem:[#allocation3 + $0x10] sm:$0x1] %vm393, %v381
    %397 = vst.msk [vmem:[#allocation3 + $0x18] sm:$0x1] %vm393, %v383
    %398 = vst.msk [vmem:[#allocation3 + $0x20] sm:$0x1] %vm393, %v366
    %399 = vst.msk [vmem:[#allocation3 + $0x28] sm:$0x1] %vm393, %v380
    %400 = vst.msk [vmem:[#allocation3 + $0x30] sm:$0x1] %vm393, %v382
    %401 = vst.msk [vmem:[#allocation3 + $0x38] sm:$0x1] %vm393, %v384
    %v402 = vpack.c.bf16 %v334, %v334
    %v404 = vsel %vm258, %v402, 0
    %406 = vmatprep.subr.bf16.mxu0 %v243
    %407 = vmatpush1.bf16.msra.mxu0 %v242
    %408 = vmatprep.subr.bf16.mxu0 %v245
    %409 = vmatpush1.bf16.msra.mxu0 %v244
    %410 = vmatprep.subr.bf16.mxu0 %v247
    %411 = vmatpush1.bf16.msra.mxu0 %v246
    %412 = vmatprep.subr.bf16.mxu0 %v249
    %413 = vmatpush1.bf16.msra.mxu0 %v248
    %414 = vmatprep.subr.bf16.mxu0 0
    %415 = vmatpush1.bf16.msra.mxu0 0
    %416 = vmatprep.subr.bf16.mxu0 0
    %417 = vmatpush1.bf16.msra.mxu0 0
    %418 = vmatprep.subr.bf16.mxu0 0
    %419 = vmatpush1.bf16.msra.mxu0 0
    %420 = vmatprep.subr.bf16.mxu0 0
    %421 = vmatpush1.bf16.msra.mxu0 0
    %422 = vmatprep.subr.bf16.mxu0 0
    %423 = vmatpush1.bf16.msra.mxu0 0
    %424 = vmatprep.subr.bf16.mxu0 0
    %425 = vmatpush1.bf16.msra.mxu0 0
    %426 = vmatprep.subr.bf16.mxu0 0
    %427 = vmatpush1.bf16.msra.mxu0 0
    %428 = vmatprep.subr.bf16.mxu0 0
    %429 = vmatpush1.bf16.msra.mxu0 0
    %430 = vmatprep.subr.bf16.mxu0 0
    %431 = vmatpush1.bf16.msra.mxu0 0
    %432 = vmatprep.subr.bf16.mxu0 0
    %433 = vmatpush1.bf16.msra.mxu0 0
    %434 = vmatprep.subr.bf16.mxu0 0
    %435 = vmatpush1.bf16.msra.mxu0 0
    %436 = vmatprep.subr.bf16.mxu0 0
    %437 = vmatpush1.bf16.msra.mxu0 0
    %438 = vmatprep.mubr.bf16.mxu0 0
    %439 = vmatmul.mubr.bf16.gmra.mrb[0].mxu0 %v404
    %v440 = vpop.f32.mrb[0].mxu0
    %v441 = vadd.f32 0.0, %v440
    %v442 = vpop.f32.mrb[0].mxu0
    %v443 = vadd.f32 0.0, %v442
    %v444 = vpop.f32.mrb[0].mxu0
    %v445 = vpop.f32.mrb[0].mxu0
    %446 = vdwg.mxu0
    %v447 = vadd.f32 %v176, %v441
    %v448 = vadd.f32 %v178, %v443
    %v449 = vxor.u32 %v447, 2147483648
    %v450 = vxor.u32 %v448, 2147483648
    %v451 = vmul.f32 %v449, 1.442695
    %v452 = vpow.pop %v451
    %v453 = vmul.f32 %v450, 1.442695
    %v454 = vpow.pop %v453
    %v455 = vadd.f32 %v452, 1.0
    %v456 = vadd.f32 %v454, 1.0
    %v457 = vrcp.pop %v455
    %v458 = vmul.f32 1.0, %v457
    %v459 = vrcp.pop %v456
    %v460 = vmul.f32 1.0, %v459
    %v461 = vtanh.pop %v448
    %v462 = vmul.f32 %v458, %v328
    %464 = vrot.lane.b32.xlu0 %v461, 64
    %v465 = vpop.permute.xlu0 %464
    %v467 = vmul.f32 %v458, %v465
    %469 = vrot.lane.b32.xlu0 %v467, 64
    %v470 = vpop.permute.xlu0 %469
    %v472 = vadd.f32 %v462, %v470
    %v473 = vtanh.pop %v472
    %475 = vrot.lane.b32.xlu0 %v473, 64
    %v476 = vpop.permute.xlu0 %475
    %v478 = vmul.f32 %v460, %v476
    %v480 = vcombine.high %v478, %v478
    %v482 = vunpack.c.l.s4 1966171168
    %v483 = vunpack.c.0.s8 %v482
    %v484 = vlaneseq
    %v485 = vshrl.u32 %v484, 7
    %v486 = vsub.s32 %v483, %v485
    %v487 = vrot.slane %v478, %v486
    %v489 = vunpack.c.l.s4 1966171168
    %v490 = vunpack.c.0.s8 %v489
    %v491 = vlaneseq
    %v492 = vshrl.u32 %v491, 7
    %v493 = vsub.s32 %v490, %v492
    %v494 = vrot.slane %v480, %v493
    %v495 = vcombine.high %v487, %v487
    %v496 = vcombine.high %v494, %v494
    %v498 = vunpack.c.l.s4 1966171168
    %v499 = vunpack.c.0.s8 %v498
    %v500 = vlaneseq
    %v501 = vshrl.u32 %v500, 7
    %v502 = vsub.s32 %v499, %v501
    %v503 = vrot.slane %v487, %v502
    %v505 = vunpack.c.l.s4 1966171168
    %v506 = vunpack.c.0.s8 %v505
    %v507 = vlaneseq
    %v508 = vshrl.u32 %v507, 7
    %v509 = vsub.s32 %v506, %v508
    %v510 = vrot.slane %v494, %v509
    %v512 = vunpack.c.l.s4 1966171168
    %v513 = vunpack.c.0.s8 %v512
    %v514 = vlaneseq
    %v515 = vshrl.u32 %v514, 7
    %v516 = vsub.s32 %v513, %v515
    %v517 = vrot.slane %v495, %v516
    %v519 = vunpack.c.l.s4 1966171168
    %v520 = vunpack.c.0.s8 %v519
    %v521 = vlaneseq
    %v522 = vshrl.u32 %v521, 7
    %v523 = vsub.s32 %v520, %v522
    %v524 = vrot.slane %v496, %v523
    %v525 = vcombine.high %v503, %v503
    %v526 = vcombine.high %v510, %v510
    %v527 = vcombine.high %v517, %v517
    %v528 = vcombine.high %v524, %v524
    %537 = vst.msk [vmem:[#allocation3 + $0x1] sm:$0x1] %vm393, %v503
    %538 = vst.msk [vmem:[#allocation3 + $0x9] sm:$0x1] %vm393, %v517
    %539 = vst.msk [vmem:[#allocation3 + $0x11] sm:$0x1] %vm393, %v525
    %540 = vst.msk [vmem:[#allocation3 + $0x19] sm:$0x1] %vm393, %v527
    %541 = vst.msk [vmem:[#allocation3 + $0x21] sm:$0x1] %vm393, %v510
    %542 = vst.msk [vmem:[#allocation3 + $0x29] sm:$0x1] %vm393, %v524
    %543 = vst.msk [vmem:[#allocation3 + $0x31] sm:$0x1] %vm393, %v526
    %544 = vst.msk [vmem:[#allocation3 + $0x39] sm:$0x1] %vm393, %v528
    %v545 = vpack.c.bf16 %v478, %v478
    %v547 = vsel %vm258, %v545, 0
    %549 = vmatprep.subr.bf16.mxu0 %v243
    %550 = vmatpush1.bf16.msra.mxu0 %v242
    %551 = vmatprep.subr.bf16.mxu0 %v245
    %552 = vmatpush1.bf16.msra.mxu0 %v244
    %553 = vmatprep.subr.bf16.mxu0 %v247
    %554 = vmatpush1.bf16.msra.mxu0 %v246
    %555 = vmatprep.subr.bf16.mxu0 %v249
    %556 = vmatpush1.bf16.msra.mxu0 %v248
    %557 = vmatprep.subr.bf16.mxu0 0
    %558 = vmatpush1.bf16.msra.mxu0 0
    %559 = vmatprep.subr.bf16.mxu0 0
    %560 = vmatpush1.bf16.msra.mxu0 0
    %561 = vmatprep.subr.bf16.mxu0 0
    %562 = vmatpush1.bf16.msra.mxu0 0
    %563 = vmatprep.subr.bf16.mxu0 0
    %564 = vmatpush1.bf16.msra.mxu0 0
    %565 = vmatprep.subr.bf16.mxu0 0
    %566 = vmatpush1.bf16.msra.mxu0 0
    %567 = vmatprep.subr.bf16.mxu0 0
    %568 = vmatpush1.bf16.msra.mxu0 0
    %569 = vmatprep.subr.bf16.mxu0 0
    %570 = vmatpush1.bf16.msra.mxu0 0
    %571 = vmatprep.subr.bf16.mxu0 0
    %572 = vmatpush1.bf16.msra.mxu0 0
    %573 = vmatprep.subr.bf16.mxu0 0
    %574 = vmatpush1.bf16.msra.mxu0 0
    %575 = vmatprep.subr.bf16.mxu0 0
    %576 = vmatpush1.bf16.msra.mxu0 0
    %577 = vmatprep.subr.bf16.mxu0 0
    %578 = vmatpush1.bf16.msra.mxu0 0
    %579 = vmatprep.subr.bf16.mxu0 0
    %580 = vmatpush1.bf16.msra.mxu0 0
    %581 = vmatprep.mubr.bf16.mxu0 0
    %582 = vmatmul.mubr.bf16.gmra.mrb[0].mxu0 %v547
    %v583 = vpop.f32.mrb[0].mxu0
    %v584 = vadd.f32 0.0, %v583
    %v585 = vpop.f32.mrb[0].mxu0
    %v586 = vadd.f32 0.0, %v585
    %v587 = vpop.f32.mrb[0].mxu0
    %v588 = vpop.f32.mrb[0].mxu0
    %589 = vdwg.mxu0
    %v590 = vadd.f32 %v182, %v584
    %v591 = vadd.f32 %v184, %v586
    %v592 = vxor.u32 %v590, 2147483648
    %v593 = vxor.u32 %v591, 2147483648
    %v594 = vmul.f32 %v592, 1.442695
    %v595 = vpow.pop %v594
    %v596 = vmul.f32 %v593, 1.442695
    %v597 = vpow.pop %v596
    %v598 = vadd.f32 %v595, 1.0
    %v599 = vadd.f32 %v597, 1.0
    %v600 = vrcp.pop %v598
    %v601 = vmul.f32 1.0, %v600
    %v602 = vrcp.pop %v599
    %v603 = vmul.f32 1.0, %v602
    %v604 = vtanh.pop %v591
    %v605 = vmul.f32 %v601, %v472
    %607 = vrot.lane.b32.xlu0 %v604, 64
    %v608 = vpop.permute.xlu0 %607
    %v610 = vmul.f32 %v601, %v608
    %612 = vrot.lane.b32.xlu0 %v610, 64
    %v613 = vpop.permute.xlu0 %612
    %v615 = vadd.f32 %v605, %v613
    %v616 = vtanh.pop %v615
    %618 = vrot.lane.b32.xlu0 %v616, 64
    %v619 = vpop.permute.xlu0 %618
    %v621 = vmul.f32 %v603, %v619
    %v623 = vcombine.high %v621, %v621
    %v625 = vunpack.c.l.s4 1966171168
    %v626 = vunpack.c.0.s8 %v625
    %v627 = vlaneseq
    %v628 = vshrl.u32 %v627, 7
    %v629 = vsub.s32 %v626, %v628
    %v630 = vrot.slane %v621, %v629
    %v632 = vunpack.c.l.s4 1966171168
    %v633 = vunpack.c.0.s8 %v632
    %v634 = vlaneseq
    %v635 = vshrl.u32 %v634, 7
    %v636 = vsub.s32 %v633, %v635
    %v637 = vrot.slane %v623, %v636
    %v638 = vcombine.high %v630, %v630
    %v639 = vcombine.high %v637, %v637
    %v641 = vunpack.c.l.s4 1966171168
    %v642 = vunpack.c.0.s8 %v641
    %v643 = vlaneseq
    %v644 = vshrl.u32 %v643, 7
    %v645 = vsub.s32 %v642, %v644
    %v646 = vrot.slane %v630, %v645
    %v648 = vunpack.c.l.s4 1966171168
    %v649 = vunpack.c.0.s8 %v648
    %v650 = vlaneseq
    %v651 = vshrl.u32 %v650, 7
    %v652 = vsub.s32 %v649, %v651
    %v653 = vrot.slane %v637, %v652
    %v655 = vunpack.c.l.s4 1966171168
    %v656 = vunpack.c.0.s8 %v655
    %v657 = vlaneseq
    %v658 = vshrl.u32 %v657, 7
    %v659 = vsub.s32 %v656, %v658
    %v660 = vrot.slane %v638, %v659
    %v662 = vunpack.c.l.s4 1966171168
    %v663 = vunpack.c.0.s8 %v662
    %v664 = vlaneseq
    %v665 = vshrl.u32 %v664, 7
    %v666 = vsub.s32 %v663, %v665
    %v667 = vrot.slane %v639, %v666
    %v668 = vcombine.high %v646, %v646
    %v669 = vcombine.high %v653, %v653
    %v670 = vcombine.high %v660, %v660
    %v671 = vcombine.high %v667, %v667
    %680 = vst.msk [vmem:[#allocation3 + $0x2] sm:$0x1] %vm393, %v646
    %681 = vst.msk [vmem:[#allocation3 + $0xa] sm:$0x1] %vm393, %v660
    %682 = vst.msk [vmem:[#allocation3 + $0x12] sm:$0x1] %vm393, %v668
    %683 = vst.msk [vmem:[#allocation3 + $0x1a] sm:$0x1] %vm393, %v670
    %684 = vst.msk [vmem:[#allocation3 + $0x22] sm:$0x1] %vm393, %v653
    %685 = vst.msk [vmem:[#allocation3 + $0x2a] sm:$0x1] %vm393, %v667
    %686 = vst.msk [vmem:[#allocation3 + $0x32] sm:$0x1] %vm393, %v669
    %687 = vst.msk [vmem:[#allocation3 + $0x3a] sm:$0x1] %vm393, %v671
    %v688 = vpack.c.bf16 %v621, %v621
    %v690 = vsel %vm258, %v688, 0
    %692 = vmatprep.subr.bf16.mxu0 %v243
    %693 = vmatpush1.bf16.msra.mxu0 %v242
    %694 = vmatprep.subr.bf16.mxu0 %v245
    %695 = vmatpush1.bf16.msra.mxu0 %v244
    %696 = vmatprep.subr.bf16.mxu0 %v247
    %697 = vmatpush1.bf16.msra.mxu0 %v246
    %698 = vmatprep.subr.bf16.mxu0 %v249
    %699 = vmatpush1.bf16.msra.mxu0 %v248
    %700 = vmatprep.subr.bf16.mxu0 0
    %701 = vmatpush1.bf16.msra.mxu0 0
    %702 = vmatprep.subr.bf16.mxu0 0
    %703 = vmatpush1.bf16.msra.mxu0 0
    %704 = vmatprep.subr.bf16.mxu0 0
    %705 = vmatpush1.bf16.msra.mxu0 0
    %706 = vmatprep.subr.bf16.mxu0 0
    %707 = vmatpush1.bf16.msra.mxu0 0
    %708 = vmatprep.subr.bf16.mxu0 0
    %709 = vmatpush1.bf16.msra.mxu0 0
    %710 = vmatprep.subr.bf16.mxu0 0
    %711 = vmatpush1.bf16.msra.mxu0 0
    %712 = vmatprep.subr.bf16.mxu0 0
    %713 = vmatpush1.bf16.msra.mxu0 0
    %714 = vmatprep.subr.bf16.mxu0 0
    %715 = vmatpush1.bf16.msra.mxu0 0
    %716 = vmatprep.subr.bf16.mxu0 0
    %717 = vmatpush1.bf16.msra.mxu0 0
    %718 = vmatprep.subr.bf16.mxu0 0
    %719 = vmatpush1.bf16.msra.mxu0 0
    %720 = vmatprep.subr.bf16.mxu0 0
    %721 = vmatpush1.bf16.msra.mxu0 0
    %722 = vmatprep.subr.bf16.mxu0 0
    %723 = vmatpush1.bf16.msra.mxu0 0
    %724 = vmatprep.mubr.bf16.mxu0 0
    %725 = vmatmul.mubr.bf16.gmra.mrb[0].mxu0 %v690
    %v726 = vpop.f32.mrb[0].mxu0
    %v727 = vadd.f32 0.0, %v726
    %v728 = vpop.f32.mrb[0].mxu0
    %v729 = vadd.f32 0.0, %v728
    %v730 = vpop.f32.mrb[0].mxu0
    %v731 = vpop.f32.mrb[0].mxu0
    %732 = vdwg.mxu0
    %v733 = vadd.f32 %v186, %v727
    %v734 = vadd.f32 %v188, %v729
    %v735 = vxor.u32 %v733, 2147483648
    %v736 = vxor.u32 %v734, 2147483648
    %v737 = vmul.f32 %v735, 1.442695
    %v738 = vpow.pop %v737
    %v739 = vmul.f32 %v736, 1.442695
    %v740 = vpow.pop %v739
    %v741 = vadd.f32 %v738, 1.0
    %v742 = vadd.f32 %v740, 1.0
    %v743 = vrcp.pop %v741
    %v744 = vmul.f32 1.0, %v743
    %v745 = vrcp.pop %v742
    %v746 = vmul.f32 1.0, %v745
    %v747 = vtanh.pop %v734
    %v748 = vmul.f32 %v744, %v615
    %750 = vrot.lane.b32.xlu0 %v747, 64
    %v751 = vpop.permute.xlu0 %750
    %v753 = vmul.f32 %v744, %v751
    %755 = vrot.lane.b32.xlu0 %v753, 64
    %v756 = vpop.permute.xlu0 %755
    %v758 = vadd.f32 %v748, %v756
    %v759 = vtanh.pop %v758
    %761 = vrot.lane.b32.xlu0 %v759, 64
    %v762 = vpop.permute.xlu0 %761
    %v764 = vmul.f32 %v746, %v762
    %v766 = vcombine.high %v764, %v764
    %v768 = vunpack.c.l.s4 1966171168
    %v769 = vunpack.c.0.s8 %v768
    %v770 = vlaneseq
    %v771 = vshrl.u32 %v770, 7
    %v772 = vsub.s32 %v769, %v771
    %v773 = vrot.slane %v764, %v772
    %v775 = vunpack.c.l.s4 1966171168
    %v776 = vunpack.c.0.s8 %v775
    %v777 = vlaneseq
    %v778 = vshrl.u32 %v777, 7
    %v779 = vsub.s32 %v776, %v778
    %v780 = vrot.slane %v766, %v779
    %v781 = vcombine.high %v773, %v773
    %v782 = vcombine.high %v780, %v780
    %v784 = vunpack.c.l.s4 1966171168
    %v785 = vunpack.c.0.s8 %v784
    %v786 = vlaneseq
    %v787 = vshrl.u32 %v786, 7
    %v788 = vsub.s32 %v785, %v787
    %v789 = vrot.slane %v773, %v788
    %v791 = vunpack.c.l.s4 1966171168
    %v792 = vunpack.c.0.s8 %v791
    %v793 = vlaneseq
    %v794 = vshrl.u32 %v793, 7
    %v795 = vsub.s32 %v792, %v794
    %v796 = vrot.slane %v780, %v795
    %v798 = vunpack.c.l.s4 1966171168
    %v799 = vunpack.c.0.s8 %v798
    %v800 = vlaneseq
    %v801 = vshrl.u32 %v800, 7
    %v802 = vsub.s32 %v799, %v801
    %v803 = vrot.slane %v781, %v802
    %v805 = vunpack.c.l.s4 1966171168
    %v806 = vunpack.c.0.s8 %v805
    %v807 = vlaneseq
    %v808 = vshrl.u32 %v807, 7
    %v809 = vsub.s32 %v806, %v808
    %v810 = vrot.slane %v782, %v809
    %v811 = vcombine.high %v789, %v789
    %v812 = vcombine.high %v796, %v796
    %v813 = vcombine.high %v803, %v803
    %v814 = vcombine.high %v810, %v810
    %823 = vst.msk [vmem:[#allocation3 + $0x3] sm:$0x1] %vm393, %v789
    %824 = vst.msk [vmem:[#allocation3 + $0xb] sm:$0x1] %vm393, %v803
    %825 = vst.msk [vmem:[#allocation3 + $0x13] sm:$0x1] %vm393, %v811
    %826 = vst.msk [vmem:[#allocation3 + $0x1b] sm:$0x1] %vm393, %v813
    %827 = vst.msk [vmem:[#allocation3 + $0x23] sm:$0x1] %vm393, %v796
    %828 = vst.msk [vmem:[#allocation3 + $0x2b] sm:$0x1] %vm393, %v810
    %829 = vst.msk [vmem:[#allocation3 + $0x33] sm:$0x1] %vm393, %v812
    %830 = vst.msk [vmem:[#allocation3 + $0x3b] sm:$0x1] %vm393, %v814
    %v831 = vpack.c.bf16 %v764, %v764
    %v833 = vsel %vm258, %v831, 0
    %835 = vmatprep.subr.bf16.mxu0 %v243
    %836 = vmatpush1.bf16.msra.mxu0 %v242
    %837 = vmatprep.subr.bf16.mxu0 %v245
    %838 = vmatpush1.bf16.msra.mxu0 %v244
    %839 = vmatprep.subr.bf16.mxu0 %v247
    %840 = vmatpush1.bf16.msra.mxu0 %v246
    %841 = vmatprep.subr.bf16.mxu0 %v249
    %842 = vmatpush1.bf16.msra.mxu0 %v248
    %843 = vmatprep.subr.bf16.mxu0 0
    %844 = vmatpush1.bf16.msra.mxu0 0
    %845 = vmatprep.subr.bf16.mxu0 0
    %846 = vmatpush1.bf16.msra.mxu0 0
    %847 = vmatprep.subr.bf16.mxu0 0
    %848 = vmatpush1.bf16.msra.mxu0 0
    %849 = vmatprep.subr.bf16.mxu0 0
    %850 = vmatpush1.bf16.msra.mxu0 0
    %851 = vmatprep.subr.bf16.mxu0 0
    %852 = vmatpush1.bf16.msra.mxu0 0
    %853 = vmatprep.subr.bf16.mxu0 0
    %854 = vmatpush1.bf16.msra.mxu0 0
    %855 = vmatprep.subr.bf16.mxu0 0
    %856 = vmatpush1.bf16.msra.mxu0 0
    %857 = vmatprep.subr.bf16.mxu0 0
    %858 = vmatpush1.bf16.msra.mxu0 0
    %859 = vmatprep.subr.bf16.mxu0 0
    %860 = vmatpush1.bf16.msra.mxu0 0
    %861 = vmatprep.subr.bf16.mxu0 0
    %862 = vmatpush1.bf16.msra.mxu0 0
    %863 = vmatprep.subr.bf16.mxu0 0
    %864 = vmatpush1.bf16.msra.mxu0 0
    %865 = vmatprep.subr.bf16.mxu0 0
    %866 = vmatpush1.bf16.msra.mxu0 0
    %867 = vmatprep.mubr.bf16.mxu0 0
    %868 = vmatmul.mubr.bf16.gmra.mrb[0].mxu0 %v833
    %v869 = vpop.f32.mrb[0].mxu0
    %v870 = vadd.f32 0.0, %v869
    %v871 = vpop.f32.mrb[0].mxu0
    %v872 = vadd.f32 0.0, %v871
    %v873 = vpop.f32.mrb[0].mxu0
    %v874 = vpop.f32.mrb[0].mxu0
    %875 = vdwg.mxu0
    %v876 = vadd.f32 %v192, %v870
    %v877 = vadd.f32 %v194, %v872
    %v878 = vxor.u32 %v876, 2147483648
    %v879 = vxor.u32 %v877, 2147483648
    %v880 = vmul.f32 %v878, 1.442695
    %v881 = vpow.pop %v880
    %v882 = vmul.f32 %v879, 1.442695
    %v883 = vpow.pop %v882
    %v884 = vadd.f32 %v881, 1.0
    %v885 = vadd.f32 %v883, 1.0
    %v886 = vrcp.pop %v884
    %v887 = vmul.f32 1.0, %v886
    %v888 = vrcp.pop %v885
    %v889 = vmul.f32 1.0, %v888
    %v890 = vtanh.pop %v877
    %v891 = vmul.f32 %v887, %v758
    %893 = vrot.lane.b32.xlu0 %v890, 64
    %v894 = vpop.permute.xlu0 %893
    %v896 = vmul.f32 %v887, %v894
    %898 = vrot.lane.b32.xlu0 %v896, 64
    %v899 = vpop.permute.xlu0 %898
    %v901 = vadd.f32 %v891, %v899
    %v902 = vtanh.pop %v901
    %904 = vrot.lane.b32.xlu0 %v902, 64
    %v905 = vpop.permute.xlu0 %904
    %v907 = vmul.f32 %v889, %v905
    %v909 = vcombine.high %v907, %v907
    %v911 = vunpack.c.l.s4 1966171168
    %v912 = vunpack.c.0.s8 %v911
    %v913 = vlaneseq
    %v914 = vshrl.u32 %v913, 7
    %v915 = vsub.s32 %v912, %v914
    %v916 = vrot.slane %v907, %v915
    %v918 = vunpack.c.l.s4 1966171168
    %v919 = vunpack.c.0.s8 %v918
    %v920 = vlaneseq
    %v921 = vshrl.u32 %v920, 7
    %v922 = vsub.s32 %v919, %v921
    %v923 = vrot.slane %v909, %v922
    %v924 = vcombine.high %v916, %v916
    %v925 = vcombine.high %v923, %v923
    %v927 = vunpack.c.l.s4 1966171168
    %v928 = vunpack.c.0.s8 %v927
    %v929 = vlaneseq
    %v930 = vshrl.u32 %v929, 7
    %v931 = vsub.s32 %v928, %v930
    %v932 = vrot.slane %v916, %v931
    %v934 = vunpack.c.l.s4 1966171168
    %v935 = vunpack.c.0.s8 %v934
    %v936 = vlaneseq
    %v937 = vshrl.u32 %v936, 7
    %v938 = vsub.s32 %v935, %v937
    %v939 = vrot.slane %v923, %v938
    %v941 = vunpack.c.l.s4 1966171168
    %v942 = vunpack.c.0.s8 %v941
    %v943 = vlaneseq
    %v944 = vshrl.u32 %v943, 7
    %v945 = vsub.s32 %v942, %v944
    %v946 = vrot.slane %v924, %v945
    %v948 = vunpack.c.l.s4 1966171168
    %v949 = vunpack.c.0.s8 %v948
    %v950 = vlaneseq
    %v951 = vshrl.u32 %v950, 7
    %v952 = vsub.s32 %v949, %v951
    %v953 = vrot.slane %v925, %v952
    %v954 = vcombine.high %v932, %v932
    %v955 = vcombine.high %v939, %v939
    %v956 = vcombine.high %v946, %v946
    %v957 = vcombine.high %v953, %v953
    %966 = vst.msk [vmem:[#allocation3 + $0x4] sm:$0x1] %vm393, %v932
    %967 = vst.msk [vmem:[#allocation3 + $0xc] sm:$0x1] %vm393, %v946
    %968 = vst.msk [vmem:[#allocation3 + $0x14] sm:$0x1] %vm393, %v954
    %969 = vst.msk [vmem:[#allocation3 + $0x1c] sm:$0x1] %vm393, %v956
    %970 = vst.msk [vmem:[#allocation3 + $0x24] sm:$0x1] %vm393, %v939
    %971 = vst.msk [vmem:[#allocation3 + $0x2c] sm:$0x1] %vm393, %v953
    %972 = vst.msk [vmem:[#allocation3 + $0x34] sm:$0x1] %vm393, %v955
    %973 = vst.msk [vmem:[#allocation3 + $0x3c] sm:$0x1] %vm393, %v957
    %v974 = vpack.c.bf16 %v907, %v907
    %v976 = vsel %vm258, %v974, 0
    %978 = vmatprep.subr.bf16.mxu0 %v243
    %979 = vmatpush1.bf16.msra.mxu0 %v242
    %980 = vmatprep.subr.bf16.mxu0 %v245
    %981 = vmatpush1.bf16.msra.mxu0 %v244
    %982 = vmatprep.subr.bf16.mxu0 %v247
    %983 = vmatpush1.bf16.msra.mxu0 %v246
    %984 = vmatprep.subr.bf16.mxu0 %v249
    %985 = vmatpush1.bf16.msra.mxu0 %v248
    %986 = vmatprep.subr.bf16.mxu0 0
    %987 = vmatpush1.bf16.msra.mxu0 0
    %988 = vmatprep.subr.bf16.mxu0 0
    %989 = vmatpush1.bf16.msra.mxu0 0
    %990 = vmatprep.subr.bf16.mxu0 0
    %991 = vmatpush1.bf16.msra.mxu0 0
    %992 = vmatprep.subr.bf16.mxu0 0
    %993 = vmatpush1.bf16.msra.mxu0 0
    %994 = vmatprep.subr.bf16.mxu0 0
    %995 = vmatpush1.bf16.msra.mxu0 0
    %996 = vmatprep.subr.bf16.mxu0 0
    %997 = vmatpush1.bf16.msra.mxu0 0
    %998 = vmatprep.subr.bf16.mxu0 0
    %999 = vmatpush1.bf16.msra.mxu0 0
    %1000 = vmatprep.subr.bf16.mxu0 0
    %1001 = vmatpush1.bf16.msra.mxu0 0
    %1002 = vmatprep.subr.bf16.mxu0 0
    %1003 = vmatpush1.bf16.msra.mxu0 0
    %1004 = vmatprep.subr.bf16.mxu0 0
    %1005 = vmatpush1.bf16.msra.mxu0 0
    %1006 = vmatprep.subr.bf16.mxu0 0
    %1007 = vmatpush1.bf16.msra.mxu0 0
    %1008 = vmatprep.subr.bf16.mxu0 0
    %1009 = vmatpush1.bf16.msra.mxu0 0
    %1010 = vmatprep.mubr.bf16.mxu0 0
    %1011 = vmatmul.mubr.bf16.gmra.mrb[0].mxu0 %v976
    %v1012 = vpop.f32.mrb[0].mxu0
    %v1013 = vadd.f32 0.0, %v1012
    %v1014 = vpop.f32.mrb[0].mxu0
    %v1015 = vadd.f32 0.0, %v1014
    %v1016 = vpop.f32.mrb[0].mxu0
    %v1017 = vpop.f32.mrb[0].mxu0
    %1018 = vdwg.mxu0
    %v1019 = vadd.f32 %v196, %v1013
    %v1020 = vadd.f32 %v198, %v1015
    %v1021 = vxor.u32 %v1019, 2147483648
    %v1022 = vxor.u32 %v1020, 2147483648
    %v1023 = vmul.f32 %v1021, 1.442695
    %v1024 = vpow.pop %v1023
    %v1025 = vmul.f32 %v1022, 1.442695
    %v1026 = vpow.pop %v1025
    %v1027 = vadd.f32 %v1024, 1.0
    %v1028 = vadd.f32 %v1026, 1.0
    %v1029 = vrcp.pop %v1027
    %v1030 = vmul.f32 1.0, %v1029
    %v1031 = vrcp.pop %v1028
    %v1032 = vmul.f32 1.0, %v1031
    %v1033 = vtanh.pop %v1020
    %v1034 = vmul.f32 %v1030, %v901
    %1036 = vrot.lane.b32.xlu0 %v1033, 64
    %v1037 = vpop.permute.xlu0 %1036
    %v1039 = vmul.f32 %v1030, %v1037
    %1041 = vrot.lane.b32.xlu0 %v1039, 64
    %v1042 = vpop.permute.xlu0 %1041
    %v1044 = vadd.f32 %v1034, %v1042
    %v1045 = vtanh.pop %v1044
    %1047 = vrot.lane.b32.xlu0 %v1045, 64
    %v1048 = vpop.permute.xlu0 %1047
    %v1050 = vmul.f32 %v1032, %v1048
    %v1052 = vcombine.high %v1050, %v1050
    %v1054 = vunpack.c.l.s4 1966171168
    %v1055 = vunpack.c.0.s8 %v1054
    %v1056 = vlaneseq
    %v1057 = vshrl.u32 %v1056, 7
    %v1058 = vsub.s32 %v1055, %v1057
    %v1059 = vrot.slane %v1050, %v1058
    %v1061 = vunpack.c.l.s4 1966171168
    %v1062 = vunpack.c.0.s8 %v1061
    %v1063 = vlaneseq
    %v1064 = vshrl.u32 %v1063, 7
    %v1065 = vsub.s32 %v1062, %v1064
    %v1066 = vrot.slane %v1052, %v1065
    %v1067 = vcombine.high %v1059, %v1059
    %v1068 = vcombine.high %v1066, %v1066
    %v1070 = vunpack.c.l.s4 1966171168
    %v1071 = vunpack.c.0.s8 %v1070
    %v1072 = vlaneseq
    %v1073 = vshrl.u32 %v1072, 7
    %v1074 = vsub.s32 %v1071, %v1073
    %v1075 = vrot.slane %v1059, %v1074
    %v1077 = vunpack.c.l.s4 1966171168
    %v1078 = vunpack.c.0.s8 %v1077
    %v1079 = vlaneseq
    %v1080 = vshrl.u32 %v1079, 7
    %v1081 = vsub.s32 %v1078, %v1080
    %v1082 = vrot.slane %v1066, %v1081
    %v1084 = vunpack.c.l.s4 1966171168
    %v1085 = vunpack.c.0.s8 %v1084
    %v1086 = vlaneseq
    %v1087 = vshrl.u32 %v1086, 7
    %v1088 = vsub.s32 %v1085, %v1087
    %v1089 = vrot.slane %v1067, %v1088
    %v1091 = vunpack.c.l.s4 1966171168
    %v1092 = vunpack.c.0.s8 %v1091
    %v1093 = vlaneseq
    %v1094 = vshrl.u32 %v1093, 7
    %v1095 = vsub.s32 %v1092, %v1094
    %v1096 = vrot.slane %v1068, %v1095
    %v1097 = vcombine.high %v1075, %v1075
    %v1098 = vcombine.high %v1082, %v1082
    %v1099 = vcombine.high %v1089, %v1089
    %v1100 = vcombine.high %v1096, %v1096
    %1109 = vst.msk [vmem:[#allocation3 + $0x5] sm:$0x1] %vm393, %v1075
    %1110 = vst.msk [vmem:[#allocation3 + $0xd] sm:$0x1] %vm393, %v1089
    %1111 = vst.msk [vmem:[#allocation3 + $0x15] sm:$0x1] %vm393, %v1097
    %1112 = vst.msk [vmem:[#allocation3 + $0x1d] sm:$0x1] %vm393, %v1099
    %1113 = vst.msk [vmem:[#allocation3 + $0x25] sm:$0x1] %vm393, %v1082
    %1114 = vst.msk [vmem:[#allocation3 + $0x2d] sm:$0x1] %vm393, %v1096
    %1115 = vst.msk [vmem:[#allocation3 + $0x35] sm:$0x1] %vm393, %v1098
    %1116 = vst.msk [vmem:[#allocation3 + $0x3d] sm:$0x1] %vm393, %v1100
    %v1117 = vpack.c.bf16 %v1050, %v1050
    %v1119 = vsel %vm258, %v1117, 0
    %1121 = vmatprep.subr.bf16.mxu0 %v243
    %1122 = vmatpush1.bf16.msra.mxu0 %v242
    %1123 = vmatprep.subr.bf16.mxu0 %v245
    %1124 = vmatpush1.bf16.msra.mxu0 %v244
    %1125 = vmatprep.subr.bf16.mxu0 %v247
    %1126 = vmatpush1.bf16.msra.mxu0 %v246
    %1127 = vmatprep.subr.bf16.mxu0 %v249
    %1128 = vmatpush1.bf16.msra.mxu0 %v248
    %1129 = vmatprep.subr.bf16.mxu0 0
    %1130 = vmatpush1.bf16.msra.mxu0 0
    %1131 = vmatprep.subr.bf16.mxu0 0
    %1132 = vmatpush1.bf16.msra.mxu0 0
    %1133 = vmatprep.subr.bf16.mxu0 0
    %1134 = vmatpush1.bf16.msra.mxu0 0
    %1135 = vmatprep.subr.bf16.mxu0 0
    %1136 = vmatpush1.bf16.msra.mxu0 0
    %1137 = vmatprep.subr.bf16.mxu0 0
    %1138 = vmatpush1.bf16.msra.mxu0 0
    %1139 = vmatprep.subr.bf16.mxu0 0
    %1140 = vmatpush1.bf16.msra.mxu0 0
    %1141 = vmatprep.subr.bf16.mxu0 0
    %1142 = vmatpush1.bf16.msra.mxu0 0
    %1143 = vmatprep.subr.bf16.mxu0 0
    %1144 = vmatpush1.bf16.msra.mxu0 0
    %1145 = vmatprep.subr.bf16.mxu0 0
    %1146 = vmatpush1.bf16.msra.mxu0 0
    %1147 = vmatprep.subr.bf16.mxu0 0
    %1148 = vmatpush1.bf16.msra.mxu0 0
    %1149 = vmatprep.subr.bf16.mxu0 0
    %1150 = vmatpush1.bf16.msra.mxu0 0
    %1151 = vmatprep.subr.bf16.mxu0 0
    %1152 = vmatpush1.bf16.msra.mxu0 0
    %1153 = vmatprep.mubr.bf16.mxu0 0
    %1154 = vmatmul.mubr.bf16.gmra.mrb[0].mxu0 %v1119
    %v1155 = vpop.f32.mrb[0].mxu0
    %v1156 = vadd.f32 0.0, %v1155
    %v1157 = vpop.f32.mrb[0].mxu0
    %v1158 = vadd.f32 0.0, %v1157
    %v1159 = vpop.f32.mrb[0].mxu0
    %v1160 = vpop.f32.mrb[0].mxu0
    %1161 = vdwg.mxu0
    %v1162 = vadd.f32 %v202, %v1156
    %v1163 = vadd.f32 %v204, %v1158
    %v1164 = vxor.u32 %v1162, 2147483648
    %v1165 = vxor.u32 %v1163, 2147483648
    %v1166 = vmul.f32 %v1164, 1.442695
    %v1167 = vpow.pop %v1166
    %v1168 = vmul.f32 %v1165, 1.442695
    %v1169 = vpow.pop %v1168
    %v1170 = vadd.f32 %v1167, 1.0
    %v1171 = vadd.f32 %v1169, 1.0
    %v1172 = vrcp.pop %v1170
    %v1173 = vmul.f32 1.0, %v1172
    %v1174 = vrcp.pop %v1171
    %v1175 = vmul.f32 1.0, %v1174
    %v1176 = vtanh.pop %v1163
    %v1177 = vmul.f32 %v1173, %v1044
    %1179 = vrot.lane.b32.xlu0 %v1176, 64
    %v1180 = vpop.permute.xlu0 %1179
    %v1182 = vmul.f32 %v1173, %v1180
    %1184 = vrot.lane.b32.xlu0 %v1182, 64
    %v1185 = vpop.permute.xlu0 %1184
    %v1187 = vadd.f32 %v1177, %v1185
    %v1188 = vtanh.pop %v1187
    %1190 = vrot.lane.b32.xlu0 %v1188, 64
    %v1191 = vpop.permute.xlu0 %1190
    %v1193 = vmul.f32 %v1175, %v1191
    %v1195 = vcombine.high %v1193, %v1193
    %v1197 = vunpack.c.l.s4 1966171168
    %v1198 = vunpack.c.0.s8 %v1197
    %v1199 = vlaneseq
    %v1200 = vshrl.u32 %v1199, 7
    %v1201 = vsub.s32 %v1198, %v1200
    %v1202 = vrot.slane %v1193, %v1201
    %v1204 = vunpack.c.l.s4 1966171168
    %v1205 = vunpack.c.0.s8 %v1204
    %v1206 = vlaneseq
    %v1207 = vshrl.u32 %v1206, 7
    %v1208 = vsub.s32 %v1205, %v1207
    %v1209 = vrot.slane %v1195, %v1208
    %v1210 = vcombine.high %v1202, %v1202
    %v1211 = vcombine.high %v1209, %v1209
    %v1213 = vunpack.c.l.s4 1966171168
    %v1214 = vunpack.c.0.s8 %v1213
    %v1215 = vlaneseq
    %v1216 = vshrl.u32 %v1215, 7
    %v1217 = vsub.s32 %v1214, %v1216
    %v1218 = vrot.slane %v1202, %v1217
    %v1220 = vunpack.c.l.s4 1966171168
    %v1221 = vunpack.c.0.s8 %v1220
    %v1222 = vlaneseq
    %v1223 = vshrl.u32 %v1222, 7
    %v1224 = vsub.s32 %v1221, %v1223
    %v1225 = vrot.slane %v1209, %v1224
    %v1227 = vunpack.c.l.s4 1966171168
    %v1228 = vunpack.c.0.s8 %v1227
    %v1229 = vlaneseq
    %v1230 = vshrl.u32 %v1229, 7
    %v1231 = vsub.s32 %v1228, %v1230
    %v1232 = vrot.slane %v1210, %v1231
    %v1234 = vunpack.c.l.s4 1966171168
    %v1235 = vunpack.c.0.s8 %v1234
    %v1236 = vlaneseq
    %v1237 = vshrl.u32 %v1236, 7
    %v1238 = vsub.s32 %v1235, %v1237
    %v1239 = vrot.slane %v1211, %v1238
    %v1240 = vcombine.high %v1218, %v1218
    %v1241 = vcombine.high %v1225, %v1225
    %v1242 = vcombine.high %v1232, %v1232
    %v1243 = vcombine.high %v1239, %v1239
    %1252 = vst.msk [vmem:[#allocation3 + $0x6] sm:$0x1] %vm393, %v1218
    %1253 = vst.msk [vmem:[#allocation3 + $0xe] sm:$0x1] %vm393, %v1232
    %1254 = vst.msk [vmem:[#allocation3 + $0x16] sm:$0x1] %vm393, %v1240
    %1255 = vst.msk [vmem:[#allocation3 + $0x1e] sm:$0x1] %vm393, %v1242
    %1256 = vst.msk [vmem:[#allocation3 + $0x26] sm:$0x1] %vm393, %v1225
    %1257 = vst.msk [vmem:[#allocation3 + $0x2e] sm:$0x1] %vm393, %v1239
    %1258 = vst.msk [vmem:[#allocation3 + $0x36] sm:$0x1] %vm393, %v1241
    %1259 = vst.msk [vmem:[#allocation3 + $0x3e] sm:$0x1] %vm393, %v1243
    %v1260 = vpack.c.bf16 %v1193, %v1193
    %v1262 = vsel %vm258, %v1260, 0
    %1264 = vmatprep.subr.bf16.mxu0 %v243
    %1265 = vmatpush1.bf16.msra.mxu0 %v242
    %1266 = vmatprep.subr.bf16.mxu0 %v245
    %1267 = vmatpush1.bf16.msra.mxu0 %v244
    %1268 = vmatprep.subr.bf16.mxu0 %v247
    %1269 = vmatpush1.bf16.msra.mxu0 %v246
    %1270 = vmatprep.subr.bf16.mxu0 %v249
    %1271 = vmatpush1.bf16.msra.mxu0 %v248
    %1272 = vmatprep.subr.bf16.mxu0 0
    %1273 = vmatpush1.bf16.msra.mxu0 0
    %1274 = vmatprep.subr.bf16.mxu0 0
    %1275 = vmatpush1.bf16.msra.mxu0 0
    %1276 = vmatprep.subr.bf16.mxu0 0
    %1277 = vmatpush1.bf16.msra.mxu0 0
    %1278 = vmatprep.subr.bf16.mxu0 0
    %1279 = vmatpush1.bf16.msra.mxu0 0
    %1280 = vmatprep.subr.bf16.mxu0 0
    %1281 = vmatpush1.bf16.msra.mxu0 0
    %1282 = vmatprep.subr.bf16.mxu0 0
    %1283 = vmatpush1.bf16.msra.mxu0 0
    %1284 = vmatprep.subr.bf16.mxu0 0
    %1285 = vmatpush1.bf16.msra.mxu0 0
    %1286 = vmatprep.subr.bf16.mxu0 0
    %1287 = vmatpush1.bf16.msra.mxu0 0
    %1288 = vmatprep.subr.bf16.mxu0 0
    %1289 = vmatpush1.bf16.msra.mxu0 0
    %1290 = vmatprep.subr.bf16.mxu0 0
    %1291 = vmatpush1.bf16.msra.mxu0 0
    %1292 = vmatprep.subr.bf16.mxu0 0
    %1293 = vmatpush1.bf16.msra.mxu0 0
    %1294 = vmatprep.subr.bf16.mxu0 0
    %1295 = vmatpush1.bf16.msra.mxu0 0
    %1296 = vmatprep.mubr.bf16.mxu0 0
    %1297 = vmatmul.mubr.bf16.gmra.mrb[0].mxu0 %v1262
    %v1298 = vpop.f32.mrb[0].mxu0
    %v1299 = vadd.f32 0.0, %v1298
    %v1300 = vpop.f32.mrb[0].mxu0
    %v1301 = vadd.f32 0.0, %v1300
    %v1302 = vpop.f32.mrb[0].mxu0
    %v1303 = vpop.f32.mrb[0].mxu0
    %1304 = vdwg.mxu0
    %v1305 = vadd.f32 %v206, %v1299
    %v1306 = vadd.f32 %v208, %v1301
    %v1307 = vxor.u32 %v1305, 2147483648
    %v1308 = vxor.u32 %v1306, 2147483648
    %v1309 = vmul.f32 %v1307, 1.442695
    %v1310 = vpow.pop %v1309
    %v1311 = vmul.f32 %v1308, 1.442695
    %v1312 = vpow.pop %v1311
    %v1313 = vadd.f32 %v1310, 1.0
    %v1314 = vadd.f32 %v1312, 1.0
    %v1315 = vrcp.pop %v1313
    %v1316 = vmul.f32 1.0, %v1315
    %v1317 = vrcp.pop %v1314
    %v1318 = vmul.f32 1.0, %v1317
    %v1319 = vtanh.pop %v1306
    %v1320 = vmul.f32 %v1316, %v1187
    %1322 = vrot.lane.b32.xlu0 %v1319, 64
    %v1323 = vpop.permute.xlu0 %1322
    %v1325 = vmul.f32 %v1316, %v1323
    %1327 = vrot.lane.b32.xlu0 %v1325, 64
    %v1328 = vpop.permute.xlu0 %1327
    %v1330 = vadd.f32 %v1320, %v1328
    %v1331 = vtanh.pop %v1330
    %1333 = vrot.lane.b32.xlu0 %v1331, 64
    %v1334 = vpop.permute.xlu0 %1333
    %v1336 = vmul.f32 %v1318, %v1334
    %v1338 = vcombine.high %v1336, %v1336
    %v1340 = vunpack.c.l.s4 1966171168
    %v1341 = vunpack.c.0.s8 %v1340
    %v1342 = vlaneseq
    %v1343 = vshrl.u32 %v1342, 7
    %v1344 = vsub.s32 %v1341, %v1343
    %v1345 = vrot.slane %v1336, %v1344
    %v1347 = vunpack.c.l.s4 1966171168
    %v1348 = vunpack.c.0.s8 %v1347
    %v1349 = vlaneseq
    %v1350 = vshrl.u32 %v1349, 7
    %v1351 = vsub.s32 %v1348, %v1350
    %v1352 = vrot.slane %v1338, %v1351
    %v1353 = vcombine.high %v1345, %v1345
    %v1354 = vcombine.high %v1352, %v1352
    %v1356 = vunpack.c.l.s4 1966171168
    %v1357 = vunpack.c.0.s8 %v1356
    %v1358 = vlaneseq
    %v1359 = vshrl.u32 %v1358, 7
    %v1360 = vsub.s32 %v1357, %v1359
    %v1361 = vrot.slane %v1345, %v1360
    %v1363 = vunpack.c.l.s4 1966171168
    %v1364 = vunpack.c.0.s8 %v1363
    %v1365 = vlaneseq
    %v1366 = vshrl.u32 %v1365, 7
    %v1367 = vsub.s32 %v1364, %v1366
    %v1368 = vrot.slane %v1352, %v1367
    %v1370 = vunpack.c.l.s4 1966171168
    %v1371 = vunpack.c.0.s8 %v1370
    %v1372 = vlaneseq
    %v1373 = vshrl.u32 %v1372, 7
    %v1374 = vsub.s32 %v1371, %v1373
    %v1375 = vrot.slane %v1353, %v1374
    %v1377 = vunpack.c.l.s4 1966171168
    %v1378 = vunpack.c.0.s8 %v1377
    %v1379 = vlaneseq
    %v1380 = vshrl.u32 %v1379, 7
    %v1381 = vsub.s32 %v1378, %v1380
    %v1382 = vrot.slane %v1354, %v1381
    %v1383 = vcombine.high %v1361, %v1361
    %v1384 = vcombine.high %v1368, %v1368
    %v1385 = vcombine.high %v1375, %v1375
    %v1386 = vcombine.high %v1382, %v1382
    %1395 = vst.msk [vmem:[#allocation3 + $0x7] sm:$0x1] %vm393, %v1361
    %1396 = vst.msk [vmem:[#allocation3 + $0xf] sm:$0x1] %vm393, %v1375
    %1397 = vst.msk [vmem:[#allocation3 + $0x17] sm:$0x1] %vm393, %v1383
    %1398 = vst.msk [vmem:[#allocation3 + $0x1f] sm:$0x1] %vm393, %v1385
    %1399 = vst.msk [vmem:[#allocation3 + $0x27] sm:$0x1] %vm393, %v1368
    %1400 = vst.msk [vmem:[#allocation3 + $0x2f] sm:$0x1] %vm393, %v1382
    %1401 = vst.msk [vmem:[#allocation3 + $0x37] sm:$0x1] %vm393, %v1384
    %1402 = vst.msk [vmem:[#allocation3 + $0x3f] sm:$0x1] %vm393, %v1386
    %v1403 = vld [vmem:[#allocation3] sm:$0xff]
    %v1404 = vld [vmem:[#allocation3 + $0x8] sm:$0xff]
    %v1405 = vld [vmem:[#allocation3 + $0x10] sm:$0xff]
    %v1406 = vld [vmem:[#allocation3 + $0x18] sm:$0xff]
    %v1407 = vld [vmem:[#allocation3 + $0x20] sm:$0xff]
    %v1408 = vld [vmem:[#allocation3 + $0x28] sm:$0xff]
    %v1409 = vld [vmem:[#allocation3 + $0x30] sm:$0xff]
    %v1410 = vld [vmem:[#allocation3 + $0x38] sm:$0xff]
    %v1411 = vpack.c.bf16 %v1403, %v1403
    %v1412 = vpack.c.bf16 %v1404, %v1404
    %v1413 = vpack.c.bf16 %v1405, %v1405
    %v1414 = vpack.c.bf16 %v1406, %v1406
    %v1415 = vpack.c.bf16 %v1407, %v1407
    %v1416 = vpack.c.bf16 %v1408, %v1408
    %v1417 = vpack.c.bf16 %v1409, %v1409
    %v1418 = vpack.c.bf16 %v1410, %v1410
    %1420 = vrot.lane.b32.xlu0 %v1411, 96
    %v1421 = vpop.permute.xlu0 %1420
    %v1423 = vsel %vm124, %v1411, 0
    %v1426 = vsel %vm124, %v1421, 0
    %1428 = vmatprep.subr.bf16.mxu0 0
    %1429 = vmatpush1.bf16.xpose.msra.mxu0 %v1426
    %1430 = vmatprep.subr.bf16.mxu0 0
    %1431 = vmatpush1.bf16.xpose.msra.mxu0 0
    %1432 = vmatprep.subr.bf16.mxu0 0
    %1433 = vmatpush1.bf16.xpose.msra.mxu0 0
    %1434 = vmatprep.subr.bf16.mxu0 0
    %1435 = vmatpush1.bf16.xpose.msra.mxu0 0
    %1436 = vmatprep.subr.bf16.mxu0 0
    %1437 = vmatpush1.bf16.xpose.msra.mxu0 0
    %1438 = vmatprep.subr.bf16.mxu0 0
    %1439 = vmatpush1.bf16.xpose.msra.mxu0 0
    %1440 = vmatprep.subr.bf16.mxu0 0
    %1441 = vmatpush1.bf16.xpose.msra.mxu0 0
    %1442 = vmatprep.subr.bf16.mxu0 0
    %1443 = vmatpush1.bf16.xpose.msra.mxu0 0
    %1444 = vmatprep.subr.bf16.mxu0 0
    %1445 = vmatpush1.bf16.xpose.msra.mxu0 0
    %1446 = vmatprep.subr.bf16.mxu0 0
    %1447 = vmatpush1.bf16.xpose.msra.mxu0 0
    %1448 = vmatprep.subr.bf16.mxu0 0
    %1449 = vmatpush1.bf16.xpose.msra.mxu0 0
    %1450 = vmatprep.subr.bf16.mxu0 0
    %1451 = vmatpush1.bf16.xpose.msra.mxu0 0
    %1452 = vmatprep.subr.bf16.mxu0 0
    %1453 = vmatpush1.bf16.xpose.msra.mxu0 0
    %1454 = vmatprep.subr.bf16.mxu0 0
    %1455 = vmatpush1.bf16.xpose.msra.mxu0 0
    %1456 = vmatprep.subr.bf16.mxu0 0
    %1457 = vmatpush1.bf16.xpose.msra.mxu0 0
    %1458 = vmatprep.subr.bf16.mxu0 0
    %1459 = vmatpush1.bf16.xpose.msra.mxu0 0
    %1460 = vmatprep.mubr.bf16.mxu0 0
    %1461 = vmatmul.mubr.bf16.gmra.mrb[0].mxu0 %v1423
    %v1462 = vpop.f32.mrb[0].mxu0
    %v1463 = vadd.f32 0.0, %v1462
    %v1464 = vpop.f32.mrb[0].mxu0
    %v1465 = vpop.f32.mrb[0].mxu0
    %v1466 = vpop.f32.mrb[0].mxu0
    %1467 = vdwg.mxu0
    %1469 = vrot.lane.b32.xlu0 %v1412, 96
    %v1470 = vpop.permute.xlu0 %1469
    %v1472 = vsel %vm124, %v1412, 0
    %v1475 = vsel %vm124, %v1470, 0
    %1477 = vmatprep.subr.bf16.mxu0 0
    %1478 = vmatpush1.bf16.xpose.msra.mxu0 %v1475
    %1479 = vmatprep.subr.bf16.mxu0 0
    %1480 = vmatpush1.bf16.xpose.msra.mxu0 0
    %1481 = vmatprep.subr.bf16.mxu0 0
    %1482 = vmatpush1.bf16.xpose.msra.mxu0 0
    %1483 = vmatprep.subr.bf16.mxu0 0
    %1484 = vmatpush1.bf16.xpose.msra.mxu0 0
    %1485 = vmatprep.subr.bf16.mxu0 0
    %1486 = vmatpush1.bf16.xpose.msra.mxu0 0
    %1487 = vmatprep.subr.bf16.mxu0 0
    %1488 = vmatpush1.bf16.xpose.msra.mxu0 0
    %1489 = vmatprep.subr.bf16.mxu0 0
    %1490 = vmatpush1.bf16.xpose.msra.mxu0 0
    %1491 = vmatprep.subr.bf16.mxu0 0
    %1492 = vmatpush1.bf16.xpose.msra.mxu0 0
    %1493 = vmatprep.subr.bf16.mxu0 0
    %1494 = vmatpush1.bf16.xpose.msra.mxu0 0
    %1495 = vmatprep.subr.bf16.mxu0 0
    %1496 = vmatpush1.bf16.xpose.msra.mxu0 0
    %1497 = vmatprep.subr.bf16.mxu0 0
    %1498 = vmatpush1.bf16.xpose.msra.mxu0 0
    %1499 = vmatprep.subr.bf16.mxu0 0
    %1500 = vmatpush1.bf16.xpose.msra.mxu0 0
    %1501 = vmatprep.subr.bf16.mxu0 0
    %1502 = vmatpush1.bf16.xpose.msra.mxu0 0
    %1503 = vmatprep.subr.bf16.mxu0 0
    %1504 = vmatpush1.bf16.xpose.msra.mxu0 0
    %1505 = vmatprep.subr.bf16.mxu0 0
    %1506 = vmatpush1.bf16.xpose.msra.mxu0 0
    %1507 = vmatprep.subr.bf16.mxu0 0
    %1508 = vmatpush1.bf16.xpose.msra.mxu0 0
    %1509 = vmatprep.mubr.bf16.mxu0 0
    %1510 = vmatmul.mubr.bf16.gmra.mrb[0].mxu0 %v1472
    %v1511 = vpop.f32.mrb[0].mxu0
    %v1512 = vadd.f32 0.0, %v1511
    %v1513 = vpop.f32.mrb[0].mxu0
    %v1514 = vpop.f32.mrb[0].mxu0
    %v1515 = vpop.f32.mrb[0].mxu0
    %1516 = vdwg.mxu0
    %1518 = vrot.lane.b32.xlu0 %v1413, 96
    %v1519 = vpop.permute.xlu0 %1518
    %v1521 = vsel %vm124, %v1413, 0
    %v1524 = vsel %vm124, %v1519, 0
    %1526 = vmatprep.subr.bf16.mxu0 0
    %1527 = vmatpush1.bf16.xpose.msra.mxu0 %v1524
    %1528 = vmatprep.subr.bf16.mxu0 0
    %1529 = vmatpush1.bf16.xpose.msra.mxu0 0
    %1530 = vmatprep.subr.bf16.mxu0 0
    %1531 = vmatpush1.bf16.xpose.msra.mxu0 0
    %1532 = vmatprep.subr.bf16.mxu0 0
    %1533 = vmatpush1.bf16.xpose.msra.mxu0 0
    %1534 = vmatprep.subr.bf16.mxu0 0
    %1535 = vmatpush1.bf16.xpose.msra.mxu0 0
    %1536 = vmatprep.subr.bf16.mxu0 0
    %1537 = vmatpush1.bf16.xpose.msra.mxu0 0
    %1538 = vmatprep.subr.bf16.mxu0 0
    %1539 = vmatpush1.bf16.xpose.msra.mxu0 0
    %1540 = vmatprep.subr.bf16.mxu0 0
    %1541 = vmatpush1.bf16.xpose.msra.mxu0 0
    %1542 = vmatprep.subr.bf16.mxu0 0
    %1543 = vmatpush1.bf16.xpose.msra.mxu0 0
    %1544 = vmatprep.subr.bf16.mxu0 0
    %1545 = vmatpush1.bf16.xpose.msra.mxu0 0
    %1546 = vmatprep.subr.bf16.mxu0 0
    %1547 = vmatpush1.bf16.xpose.msra.mxu0 0
    %1548 = vmatprep.subr.bf16.mxu0 0
    %1549 = vmatpush1.bf16.xpose.msra.mxu0 0
    %1550 = vmatprep.subr.bf16.mxu0 0
    %1551 = vmatpush1.bf16.xpose.msra.mxu0 0
    %1552 = vmatprep.subr.bf16.mxu0 0
    %1553 = vmatpush1.bf16.xpose.msra.mxu0 0
    %1554 = vmatprep.subr.bf16.mxu0 0
    %1555 = vmatpush1.bf16.xpose.msra.mxu0 0
    %1556 = vmatprep.subr.bf16.mxu0 0
    %1557 = vmatpush1.bf16.xpose.msra.mxu0 0
    %1558 = vmatprep.mubr.bf16.mxu0 0
    %1559 = vmatmul.mubr.bf16.gmra.mrb[0].mxu0 %v1521
    %v1560 = vpop.f32.mrb[0].mxu0
    %v1561 = vadd.f32 0.0, %v1560
    %v1562 = vpop.f32.mrb[0].mxu0
    %v1563 = vpop.f32.mrb[0].mxu0
    %v1564 = vpop.f32.mrb[0].mxu0
    %1565 = vdwg.mxu0
    %1567 = vrot.lane.b32.xlu0 %v1414, 96
    %v1568 = vpop.permute.xlu0 %1567
    %v1570 = vsel %vm124, %v1414, 0
    %v1573 = vsel %vm124, %v1568, 0
    %1575 = vmatprep.subr.bf16.mxu0 0
    %1576 = vmatpush1.bf16.xpose.msra.mxu0 %v1573
    %1577 = vmatprep.subr.bf16.mxu0 0
    %1578 = vmatpush1.bf16.xpose.msra.mxu0 0
    %1579 = vmatprep.subr.bf16.mxu0 0
    %1580 = vmatpush1.bf16.xpose.msra.mxu0 0
    %1581 = vmatprep.subr.bf16.mxu0 0
    %1582 = vmatpush1.bf16.xpose.msra.mxu0 0
    %1583 = vmatprep.subr.bf16.mxu0 0
    %1584 = vmatpush1.bf16.xpose.msra.mxu0 0
    %1585 = vmatprep.subr.bf16.mxu0 0
    %1586 = vmatpush1.bf16.xpose.msra.mxu0 0
    %1587 = vmatprep.subr.bf16.mxu0 0
    %1588 = vmatpush1.bf16.xpose.msra.mxu0 0
    %1589 = vmatprep.subr.bf16.mxu0 0
    %1590 = vmatpush1.bf16.xpose.msra.mxu0 0
    %1591 = vmatprep.subr.bf16.mxu0 0
    %1592 = vmatpush1.bf16.xpose.msra.mxu0 0
    %1593 = vmatprep.subr.bf16.mxu0 0
    %1594 = vmatpush1.bf16.xpose.msra.mxu0 0
    %1595 = vmatprep.subr.bf16.mxu0 0
    %1596 = vmatpush1.bf16.xpose.msra.mxu0 0
    %1597 = vmatprep.subr.bf16.mxu0 0
    %1598 = vmatpush1.bf16.xpose.msra.mxu0 0
    %1599 = vmatprep.subr.bf16.mxu0 0
    %1600 = vmatpush1.bf16.xpose.msra.mxu0 0
    %1601 = vmatprep.subr.bf16.mxu0 0
    %1602 = vmatpush1.bf16.xpose.msra.mxu0 0
    %1603 = vmatprep.subr.bf16.mxu0 0
    %1604 = vmatpush1.bf16.xpose.msra.mxu0 0
    %1605 = vmatprep.subr.bf16.mxu0 0
    %1606 = vmatpush1.bf16.xpose.msra.mxu0 0
    %1607 = vmatprep.mubr.bf16.mxu0 0
    %1608 = vmatmul.mubr.bf16.gmra.mrb[0].mxu0 %v1570
    %v1609 = vpop.f32.mrb[0].mxu0
    %v1610 = vadd.f32 0.0, %v1609
    %v1611 = vpop.f32.mrb[0].mxu0
    %v1612 = vpop.f32.mrb[0].mxu0
    %v1613 = vpop.f32.mrb[0].mxu0
    %1614 = vdwg.mxu0
    %1616 = vrot.lane.b32.xlu0 %v1415, 96
    %v1617 = vpop.permute.xlu0 %1616
    %v1619 = vsel %vm124, %v1415, 0
    %v1622 = vsel %vm124, %v1617, 0
    %1624 = vmatprep.subr.bf16.mxu0 0
    %1625 = vmatpush1.bf16.xpose.msra.mxu0 %v1622
    %1626 = vmatprep.subr.bf16.mxu0 0
    %1627 = vmatpush1.bf16.xpose.msra.mxu0 0
    %1628 = vmatprep.subr.bf16.mxu0 0
    %1629 = vmatpush1.bf16.xpose.msra.mxu0 0
    %1630 = vmatprep.subr.bf16.mxu0 0
    %1631 = vmatpush1.bf16.xpose.msra.mxu0 0
    %1632 = vmatprep.subr.bf16.mxu0 0
    %1633 = vmatpush1.bf16.xpose.msra.mxu0 0
    %1634 = vmatprep.subr.bf16.mxu0 0
    %1635 = vmatpush1.bf16.xpose.msra.mxu0 0
    %1636 = vmatprep.subr.bf16.mxu0 0
    %1637 = vmatpush1.bf16.xpose.msra.mxu0 0
    %1638 = vmatprep.subr.bf16.mxu0 0
    %1639 = vmatpush1.bf16.xpose.msra.mxu0 0
    %1640 = vmatprep.subr.bf16.mxu0 0
    %1641 = vmatpush1.bf16.xpose.msra.mxu0 0
    %1642 = vmatprep.subr.bf16.mxu0 0
    %1643 = vmatpush1.bf16.xpose.msra.mxu0 0
    %1644 = vmatprep.subr.bf16.mxu0 0
    %1645 = vmatpush1.bf16.xpose.msra.mxu0 0
    %1646 = vmatprep.subr.bf16.mxu0 0
    %1647 = vmatpush1.bf16.xpose.msra.mxu0 0
    %1648 = vmatprep.subr.bf16.mxu0 0
    %1649 = vmatpush1.bf16.xpose.msra.mxu0 0
    %1650 = vmatprep.subr.bf16.mxu0 0
    %1651 = vmatpush1.bf16.xpose.msra.mxu0 0
    %1652 = vmatprep.subr.bf16.mxu0 0
    %1653 = vmatpush1.bf16.xpose.msra.mxu0 0
    %1654 = vmatprep.subr.bf16.mxu0 0
    %1655 = vmatpush1.bf16.xpose.msra.mxu0 0
    %1656 = vmatprep.mubr.bf16.mxu0 0
    %1657 = vmatmul.mubr.bf16.gmra.mrb[0].mxu0 %v1619
    %v1658 = vpop.f32.mrb[0].mxu0
    %v1659 = vadd.f32 0.0, %v1658
    %v1660 = vpop.f32.mrb[0].mxu0
    %v1661 = vpop.f32.mrb[0].mxu0
    %v1662 = vpop.f32.mrb[0].mxu0
    %1663 = vdwg.mxu0
    %1665 = vrot.lane.b32.xlu0 %v1416, 96
    %v1666 = vpop.permute.xlu0 %1665
    %v1668 = vsel %vm124, %v1416, 0
    %v1671 = vsel %vm124, %v1666, 0
    %1673 = vmatprep.subr.bf16.mxu0 0
    %1674 = vmatpush1.bf16.xpose.msra.mxu0 %v1671
    %1675 = vmatprep.subr.bf16.mxu0 0
    %1676 = vmatpush1.bf16.xpose.msra.mxu0 0
    %1677 = vmatprep.subr.bf16.mxu0 0
    %1678 = vmatpush1.bf16.xpose.msra.mxu0 0
    %1679 = vmatprep.subr.bf16.mxu0 0
    %1680 = vmatpush1.bf16.xpose.msra.mxu0 0
    %1681 = vmatprep.subr.bf16.mxu0 0
    %1682 = vmatpush1.bf16.xpose.msra.mxu0 0
    %1683 = vmatprep.subr.bf16.mxu0 0
    %1684 = vmatpush1.bf16.xpose.msra.mxu0 0
    %1685 = vmatprep.subr.bf16.mxu0 0
    %1686 = vmatpush1.bf16.xpose.msra.mxu0 0
    %1687 = vmatprep.subr.bf16.mxu0 0
    %1688 = vmatpush1.bf16.xpose.msra.mxu0 0
    %1689 = vmatprep.subr.bf16.mxu0 0
    %1690 = vmatpush1.bf16.xpose.msra.mxu0 0
    %1691 = vmatprep.subr.bf16.mxu0 0
    %1692 = vmatpush1.bf16.xpose.msra.mxu0 0
    %1693 = vmatprep.subr.bf16.mxu0 0
    %1694 = vmatpush1.bf16.xpose.msra.mxu0 0
    %1695 = vmatprep.subr.bf16.mxu0 0
    %1696 = vmatpush1.bf16.xpose.msra.mxu0 0
    %1697 = vmatprep.subr.bf16.mxu0 0
    %1698 = vmatpush1.bf16.xpose.msra.mxu0 0
    %1699 = vmatprep.subr.bf16.mxu0 0
    %1700 = vmatpush1.bf16.xpose.msra.mxu0 0
    %1701 = vmatprep.subr.bf16.mxu0 0
    %1702 = vmatpush1.bf16.xpose.msra.mxu0 0
    %1703 = vmatprep.subr.bf16.mxu0 0
    %1704 = vmatpush1.bf16.xpose.msra.mxu0 0
    %1705 = vmatprep.mubr.bf16.mxu0 0
    %1706 = vmatmul.mubr.bf16.gmra.mrb[0].mxu0 %v1668
    %v1707 = vpop.f32.mrb[0].mxu0
    %v1708 = vadd.f32 0.0, %v1707
    %v1709 = vpop.f32.mrb[0].mxu0
    %v1710 = vpop.f32.mrb[0].mxu0
    %v1711 = vpop.f32.mrb[0].mxu0
    %1712 = vdwg.mxu0
    %1714 = vrot.lane.b32.xlu0 %v1417, 96
    %v1715 = vpop.permute.xlu0 %1714
    %v1717 = vsel %vm124, %v1417, 0
    %v1720 = vsel %vm124, %v1715, 0
    %1722 = vmatprep.subr.bf16.mxu0 0
    %1723 = vmatpush1.bf16.xpose.msra.mxu0 %v1720
    %1724 = vmatprep.subr.bf16.mxu0 0
    %1725 = vmatpush1.bf16.xpose.msra.mxu0 0
    %1726 = vmatprep.subr.bf16.mxu0 0
    %1727 = vmatpush1.bf16.xpose.msra.mxu0 0
    %1728 = vmatprep.subr.bf16.mxu0 0
    %1729 = vmatpush1.bf16.xpose.msra.mxu0 0
    %1730 = vmatprep.subr.bf16.mxu0 0
    %1731 = vmatpush1.bf16.xpose.msra.mxu0 0
    %1732 = vmatprep.subr.bf16.mxu0 0
    %1733 = vmatpush1.bf16.xpose.msra.mxu0 0
    %1734 = vmatprep.subr.bf16.mxu0 0
    %1735 = vmatpush1.bf16.xpose.msra.mxu0 0
    %1736 = vmatprep.subr.bf16.mxu0 0
    %1737 = vmatpush1.bf16.xpose.msra.mxu0 0
    %1738 = vmatprep.subr.bf16.mxu0 0
    %1739 = vmatpush1.bf16.xpose.msra.mxu0 0
    %1740 = vmatprep.subr.bf16.mxu0 0
    %1741 = vmatpush1.bf16.xpose.msra.mxu0 0
    %1742 = vmatprep.subr.bf16.mxu0 0
    %1743 = vmatpush1.bf16.xpose.msra.mxu0 0
    %1744 = vmatprep.subr.bf16.mxu0 0
    %1745 = vmatpush1.bf16.xpose.msra.mxu0 0
    %1746 = vmatprep.subr.bf16.mxu0 0
    %1747 = vmatpush1.bf16.xpose.msra.mxu0 0
    %1748 = vmatprep.subr.bf16.mxu0 0
    %1749 = vmatpush1.bf16.xpose.msra.mxu0 0
    %1750 = vmatprep.subr.bf16.mxu0 0
    %1751 = vmatpush1.bf16.xpose.msra.mxu0 0
    %1752 = vmatprep.subr.bf16.mxu0 0
    %1753 = vmatpush1.bf16.xpose.msra.mxu0 0
    %1754 = vmatprep.mubr.bf16.mxu0 0
    %1755 = vmatmul.mubr.bf16.gmra.mrb[0].mxu0 %v1717
    %v1756 = vpop.f32.mrb[0].mxu0
    %v1757 = vadd.f32 0.0, %v1756
    %v1758 = vpop.f32.mrb[0].mxu0
    %v1759 = vpop.f32.mrb[0].mxu0
    %v1760 = vpop.f32.mrb[0].mxu0
    %1761 = vdwg.mxu0
    %1763 = vrot.lane.b32.xlu0 %v1418, 96
    %v1764 = vpop.permute.xlu0 %1763
    %v1766 = vsel %vm124, %v1418, 0
    %v1769 = vsel %vm124, %v1764, 0
    %1771 = vmatprep.subr.bf16.mxu0 0
    %1772 = vmatpush1.bf16.xpose.msra.mxu0 %v1769
    %1773 = vmatprep.subr.bf16.mxu0 0
    %1774 = vmatpush1.bf16.xpose.msra.mxu0 0
    %1775 = vmatprep.subr.bf16.mxu0 0
    %1776 = vmatpush1.bf16.xpose.msra.mxu0 0
    %1777 = vmatprep.subr.bf16.mxu0 0
    %1778 = vmatpush1.bf16.xpose.msra.mxu0 0
    %1779 = vmatprep.subr.bf16.mxu0 0
    %1780 = vmatpush1.bf16.xpose.msra.mxu0 0
    %1781 = vmatprep.subr.bf16.mxu0 0
    %1782 = vmatpush1.bf16.xpose.msra.mxu0 0
    %1783 = vmatprep.subr.bf16.mxu0 0
    %1784 = vmatpush1.bf16.xpose.msra.mxu0 0
    %1785 = vmatprep.subr.bf16.mxu0 0
    %1786 = vmatpush1.bf16.xpose.msra.mxu0 0
    %1787 = vmatprep.subr.bf16.mxu0 0
    %1788 = vmatpush1.bf16.xpose.msra.mxu0 0
    %1789 = vmatprep.subr.bf16.mxu0 0
    %1790 = vmatpush1.bf16.xpose.msra.mxu0 0
    %1791 = vmatprep.subr.bf16.mxu0 0
    %1792 = vmatpush1.bf16.xpose.msra.mxu0 0
    %1793 = vmatprep.subr.bf16.mxu0 0
    %1794 = vmatpush1.bf16.xpose.msra.mxu0 0
    %1795 = vmatprep.subr.bf16.mxu0 0
    %1796 = vmatpush1.bf16.xpose.msra.mxu0 0
    %1797 = vmatprep.subr.bf16.mxu0 0
    %1798 = vmatpush1.bf16.xpose.msra.mxu0 0
    %1799 = vmatprep.subr.bf16.mxu0 0
    %1800 = vmatpush1.bf16.xpose.msra.mxu0 0
    %1801 = vmatprep.subr.bf16.mxu0 0
    %1802 = vmatpush1.bf16.xpose.msra.mxu0 0
    %1803 = vmatprep.mubr.bf16.mxu0 0
    %1804 = vmatmul.mubr.bf16.gmra.mrb[0].mxu0 %v1766
    %v1805 = vpop.f32.mrb[0].mxu0
    %v1806 = vadd.f32 0.0, %v1805
    %v1807 = vpop.f32.mrb[0].mxu0
    %v1808 = vpop.f32.mrb[0].mxu0
    %v1809 = vpop.f32.mrb[0].mxu0
    %1810 = vdwg.mxu0
    %vm1811 = vcmask 64512
    %1812 = vst.msk [vmem:[#allocation10] sm:$0xff] %vm1811, %v1463
    %1813 = vst.msk [vmem:[#allocation10 + $0x8] sm:$0xff] %vm1811, %v1512
    %1814 = vst.msk [vmem:[#allocation10 + $0x10] sm:$0xff] %vm1811, %v1561
    %1815 = vst.msk [vmem:[#allocation10 + $0x18] sm:$0xff] %vm1811, %v1610
    %1816 = vst.msk [vmem:[#allocation10 + $0x20] sm:$0xff] %vm1811, %v1659
    %1817 = vst.msk [vmem:[#allocation10 + $0x28] sm:$0xff] %vm1811, %v1708
    %1818 = vst.msk [vmem:[#allocation10 + $0x30] sm:$0xff] %vm1811, %v1757
    %1819 = vst.msk [vmem:[#allocation10 + $0x38] sm:$0xff] %vm1811, %v1806
    // Predicated region
    $region30: #{tpu_custom_call.1} parent=1 // pred_check
      _
    $region31: #{tpu_custom_call.1} parent=1 // pred_check_branch
      %1821 = sbr.rel (0) target = $region33
    $region32: #{tpu_custom_call.1} parent=1 // pred_region
      %s1823 = ssub.s32 1024, 1024
      %1824 = vsyncadd [#allocation6], %s1823
      %s1825 = sshll.u32 [#allocation10], 4
      %s1826 = int_to_ptr.vmem [resolvable:$true] %s1825
      %1831 = dma.vmem_to_hbm [thread:$0]  %s1826, 1024, %s4, [#allocation6], 128, 128, 8
    $region33: #{tpu_custom_call.1} parent=1 // pred_fallthru
      _
    // Predicated region
    $region34: #{tpu_custom_call.1} parent=1 // pred_check
      _
    $region35: #{tpu_custom_call.1} parent=1 // pred_check_branch
      %1833 = sbr.rel (0) target = $region37
    $region36: #{tpu_custom_call.1} parent=1 // pred_region
      %1834 = dma.done [#allocation6], 1024
    $region37: #{tpu_custom_call.1} parent=1 // pred_fallthru
      _
    %1835 = vsyncpa [#allocation5], 1
    %1836 = vsyncpa [#allocation8], 1
    %1837 = vsyncpa [#allocation6], 1

</llo_original>
